<compile_context>
chip_gen: v7x
topology: tpu7x:2x2x1
jax: 0.10.0
libtpu: 0.0.40
codegen_flags: <defaults>
</compile_context>

<pallas_src>
import functools

import jax
import jax.numpy as jnp
from jax.experimental import pallas as pl
from jax.experimental.pallas import tpu as pltpu

DIM = 64            # GIN hidden width (as in the PyTorch module)
DIM_PAD = 128       # lane-padded width
ROW_TILE = 256      # adjacency row tile (>= 256 fills the 256x256 MXU)
BN_EPS = 1e-5
NUM_LAYERS = 5


def _round_up(v, m):
    return (v + m - 1) // m * m


# ----------------------------------------------------------------------------
# Fused kernel: grid = (layer, node-row tile).
#   per step : agg = adj_tile @ h  ->  GIN MLP  ->  relu  -> masked stats
#   per layer: BN finalize, global_add_pool, fc1 accumulation (pl.when)
#   last step: fc1 bias + relu + fc2 -> lane-dense [Gp, 128] output
# ----------------------------------------------------------------------------
def fused_gin_kernel(n_ref,                      # SMEM [1] int32: real node count
                     x_ref, adj_ref, pool_ref,
                     w1_ref, b1_ref, w2_ref, b2_ref, gamma_ref, beta_ref,
                     fw1_ref, fb1_ref, fw2_ref, fb2_ref,
                     out_ref,
                     h_bf16, z_scr, sum_scr, ssq_scr, head_acc):
    l = pl.program_id(0)                         # layer index
    i = pl.program_id(1)                         # node-row tile index
    n_tiles = pl.num_programs(1)
    tm = adj_ref.shape[0]                        # static row-tile size

    n_real = n_ref[0]
    inv_n = 1.0 / n_real.astype(jnp.float32)

    # Very first grid step: seed resident activations with the padded input
    # features (bf16 for the aggregation matmul) and zero the fc1 accumulator.
    @pl.when(jnp.logical_and(l == 0, i == 0))
    def _():
        h_bf16[...] = x_ref[...].astype(jnp.bfloat16)
        head_acc[...] = jnp.zeros_like(head_acc)

    # Start of every layer: reset BatchNorm statistics accumulators.
    @pl.when(i == 0)
    def _():
        sum_scr[...] = jnp.zeros_like(sum_scr)
        ssq_scr[...] = jnp.zeros_like(ssq_scr)

    # GINConv sum aggregation for this row tile (bf16 x bf16 -> f32 on MXU):
    # (1 + eps) * x_i + sum_j x_j  ==  (A + I) @ h  with eps = 0 folded into adj.
    agg = jnp.dot(adj_ref[...], h_bf16[...], preferred_element_type=jnp.float32)

    # GIN MLP (Linear -> ReLU -> Linear) then the outer F.relu, all in f32.
    z = jnp.dot(agg, w1_ref[...], preferred_element_type=jnp.float32) + b1_ref[...]
    z = jnp.maximum(z, 0.0)
    z = jnp.dot(z, w2_ref[...], preferred_element_type=jnp.float32) + b2_ref[...]
    z = jnp.maximum(z, 0.0)

    # Mask padded rows so BatchNorm statistics only see real nodes.
    row = jax.lax.broadcasted_iota(jnp.int32, (tm, 1), 0) + i * tm
    z = jnp.where(row < n_real, z, 0.0)

    # Stash the tile and accumulate masked column sums (training-mode stats).
    start = pl.multiple_of(i * tm, tm)
    z_scr[pl.ds(start, tm), :] = z
    sum_scr[...] += jnp.sum(z, axis=0, keepdims=True)
    ssq_scr[...] += jnp.sum(z * z, axis=0, keepdims=True)

    # Last row tile of this layer: BatchNorm over all nodes (biased variance,
    # real nodes only), global_add_pool, per-layer fc1 accumulation, and hand
    # the normalized activations to the next layer.
    @pl.when(i == n_tiles - 1)
    def _():
        mean = sum_scr[...] * inv_n
        var = jnp.maximum(ssq_scr[...] * inv_n - mean * mean, 0.0)
        scale = gamma_ref[...] * jax.lax.rsqrt(var + BN_EPS)
        shift = beta_ref[...] - mean * scale
        y = z_scr[...] * scale + shift                       # [Np, 128] f32
        h_bf16[...] = y.astype(jnp.bfloat16)                 # next layer's input
        pooled = jnp.dot(pool_ref[...], y, preferred_element_type=jnp.float32)
        head_acc[...] += jnp.dot(pooled, fw1_ref[...],
                                 preferred_element_type=jnp.float32)

    # Very last grid step: finish the MLP head.
    @pl.when(jnp.logical_and(l == pl.num_programs(0) - 1, i == n_tiles - 1))
    def _():
        hh = jnp.maximum(head_acc[...] + fb1_ref[...], 0.0)
        out_ref[...] = (jnp.dot(hh, fw2_ref[...], preferred_element_type=jnp.float32)
                        + fb2_ref[...])


# ----------------------------------------------------------------------------
# Parameter packing: pad to 128 lanes, stack the 5 layers, split fc1 per layer.
# ----------------------------------------------------------------------------
def prepare_params(params):
    def pad2(w):
        return jnp.pad(w, ((0, DIM_PAD - w.shape[0]), (0, DIM_PAD - w.shape[1])))

    def padv(v):
        return jnp.pad(v, (0, DIM_PAD - v.shape[0])).reshape(1, DIM_PAD)

    w1s, b1s, w2s, b2s, gammas, betas = [], [], [], [], [], []
    for (w1, b1, w2, b2, gamma, beta) in params["layers"]:
        w1s.append(pad2(w1)); b1s.append(padv(b1))
        w2s.append(pad2(w2)); b2s.append(padv(b2))
        gammas.append(padv(gamma)); betas.append(padv(beta))
    w1s = jnp.stack(w1s)        # [5, 128, 128]
    b1s = jnp.stack(b1s)        # [5, 1, 128]
    w2s = jnp.stack(w2s)
    b2s = jnp.stack(b2s)
    gammas = jnp.stack(gammas)
    betas = jnp.stack(betas)

    fw1, fb1, fw2, fb2 = params["head"]
    # fc1 is accumulated per layer inside the kernel: pack its K dimension as
    # [layer, 128, 128] blocks (real rows 0:64, real cols 0:64 of each block).
    fw1_p = jnp.zeros((NUM_LAYERS, DIM_PAD, DIM_PAD), jnp.float32)
    for l in range(NUM_LAYERS):
        fw1_p = fw1_p.at[l, :DIM, :DIM].set(fw1[l * DIM:(l + 1) * DIM, :])
    fb1_p = padv(fb1)
    fw2_p = pad2(fw2)           # real block is [0:64, 0:1]
    fb2_p = padv(fb2)
    return (w1s, b1s, w2s, b2s, gammas, betas, fw1_p, fb1_p, fw2_p, fb2_p)


# ----------------------------------------------------------------------------
# Forward pass: build padded adj/pool once, one fused pallas_call with a
# (layer, row-tile) grid that streams the adjacency from HBM.
# ----------------------------------------------------------------------------
@functools.partial(jax.jit, static_argnames=("num_graphs",))
def net_forward(x, edge_index, batch, packed_params, num_graphs):
    n, f = x.shape
    n_pad = _round_up(n, ROW_TILE)
    g_pad = _round_up(num_graphs, 8)
    n_tiles = n_pad // ROW_TILE

    src, dst = edge_index[0], edge_index[1]
    node_ids = jnp.arange(n, dtype=jnp.int32)

    # Dense adjacency built directly at padded size in bf16 (edge counts are
    # exact in bf16); the GIN self term is folded in once: adj = A + I (eps=0).
    adj = jnp.zeros((n_pad, n_pad), jnp.bfloat16)
    adj = adj.at[dst, src].add(1.0)
    adj = adj.at[node_ids, node_ids].add(1.0)

    # Pooling one-hot matrix P[g, node] = 1 iff batch[node] == g (padded size).
    pool = jnp.zeros((g_pad, n_pad), jnp.float32).at[batch, node_ids].set(1.0)

    x_p = jnp.pad(x.astype(jnp.float32), ((0, n_pad - n), (0, DIM_PAD - f)))
    n_scal = jnp.array([n], dtype=jnp.int32)   # runtime scalar (SMEM prefetch)

    # Explicit VMEM budget (default scoped limit is only 16 MiB on v5e).
    bytes_est = (2 * ROW_TILE * n_pad * 2          # double-buffered adj tiles (bf16)
                 + 2 * n_pad * DIM_PAD * 4         # input features
                 + 2 * g_pad * n_pad * 4           # pool matrix
                 + n_pad * DIM_PAD * (2 + 4)       # h (bf16) + z (f32) scratches
                 + 4 * g_pad * DIM_PAD * 4         # fc1 accumulator + output
                 + (4 << 20))                      # weights + slack
    vmem_limit = int(min(max(bytes_est * 3 // 2, 32 << 20), 64 << 20))

    def lspec(shape):   # per-layer (squeezed) parameter block
        return pl.BlockSpec(shape, lambda l, i, s: (l, 0, 0))

    def cspec(shape):   # constant-index (resident) 2-D block
        return pl.BlockSpec(shape, lambda l, i, s: (0, 0))

    grid_spec = pltpu.PrefetchScalarGridSpec(
        num_scalar_prefetch=1,
        grid=(NUM_LAYERS, n_tiles),
        in_specs=[
            cspec((n_pad, DIM_PAD)),                                   # x
            pl.BlockSpec((ROW_TILE, n_pad), lambda l, i, s: (i, 0)),   # adj row tile
            cspec((g_pad, n_pad)),                                     # pool
            lspec((None, DIM_PAD, DIM_PAD)),                           # w1s
            lspec((None, 1, DIM_PAD)),                                 # b1s
            lspec((None, DIM_PAD, DIM_PAD)),                           # w2s
            lspec((None, 1, DIM_PAD)),                                 # b2s
            lspec((None, 1, DIM_PAD)),                                 # gammas
            lspec((None, 1, DIM_PAD)),                                 # betas
            lspec((None, DIM_PAD, DIM_PAD)),                           # fw1 per-layer block
            cspec((1, DIM_PAD)),                                       # fb1
            cspec((DIM_PAD, DIM_PAD)),                                 # fw2
            cspec((1, DIM_PAD)),                                       # fb2
        ],
        out_specs=pl.BlockSpec((g_pad, DIM_PAD), lambda l, i, s: (0, 0)),
        scratch_shapes=[
            pltpu.VMEM((n_pad, DIM_PAD), jnp.bfloat16),   # h: current layer input
            pltpu.VMEM((n_pad, DIM_PAD), jnp.float32),    # z: pre-BN activations
            pltpu.VMEM((1, DIM_PAD), jnp.float32),        # column sums
            pltpu.VMEM((1, DIM_PAD), jnp.float32),        # column sums of squares
            pltpu.VMEM((g_pad, DIM_PAD), jnp.float32),    # fc1 accumulator
        ],
    )

    out = pl.pallas_call(
        fused_gin_kernel,
        out_shape=jax.ShapeDtypeStruct((g_pad, DIM_PAD), jnp.float32),
        grid_spec=grid_spec,
        compiler_params=pltpu.CompilerParams(
            dimension_semantics=("arbitrary", "arbitrary"),
            vmem_limit_bytes=vmem_limit),
    )(n_scal, x_p, adj, pool, *packed_params)
    return out[:num_graphs, 0]                  # x.view(-1)


# ----------------------------------------------------------------------------
# Deterministic parameter init (PyTorch Linear-style uniform init, [in, out]).
# ----------------------------------------------------------------------------
def init_params(key, num_features):
    def linear(k, fan_in, fan_out):
        kw, kb = jax.random.split(k)
        bound = 1.0 / float(jnp.sqrt(fan_in))
        w = jax.random.uniform(kw, (fan_in, fan_out), jnp.float32, -bound, bound)
        b = jax.random.uniform(kb, (fan_out,), jnp.float32, -bound, bound)
        return w, b

    params = {"layers": []}
    in_dim = num_features
    keys = jax.random.split(key, NUM_LAYERS + 1)
    for i in range(NUM_LAYERS):
        k1, k2 = jax.random.split(keys[i])
        w1, b1 = linear(k1, in_dim, DIM)
        w2, b2 = linear(k2, DIM, DIM)
        gamma = jnp.ones((DIM,), jnp.float32)    # BatchNorm weight
        beta = jnp.zeros((DIM,), jnp.float32)    # BatchNorm bias
        params["layers"].append((w1, b1, w2, b2, gamma, beta))
        in_dim = DIM
    kf1, kf2 = jax.random.split(keys[NUM_LAYERS])
    fw1, fb1 = linear(kf1, NUM_LAYERS * DIM, DIM)
    fw2, fb2 = linear(kf2, DIM, 1)
    params["head"] = (fw1, fb1, fw2, fb2)
    return params


# ----------------------------------------------------------------------------
# Pure-JAX reference (unpadded, full f32) used only as a runtime sanity check.
# ----------------------------------------------------------------------------
def reference_forward(x, edge_index, batch, params, num_graphs):
    hp = jax.lax.Precision.HIGHEST
    n = x.shape[0]
    src, dst = edge_index[0], edge_index[1]
    adj = jnp.zeros((n, n), jnp.float32).at[dst, src].add(1.0)
    pool = (batch[None, :] == jnp.arange(num_graphs, dtype=batch.dtype)[:, None]
            ).astype(jnp.float32)
    h = x
    pooled = []
    for (w1, b1, w2, b2, gamma, beta) in params["layers"]:
        agg = h + jnp.dot(adj, h, precision=hp)
        z = jnp.maximum(jnp.dot(agg, w1, precision=hp) + b1, 0.0)
        z = jnp.dot(z, w2, precision=hp) + b2
        z = jnp.maximum(z, 0.0)
        mean = jnp.mean(z, axis=0, keepdims=True)
        var = jnp.mean((z - mean) ** 2, axis=0, keepdims=True)
        h = (z - mean) / jnp.sqrt(var + BN_EPS) * gamma + beta
        pooled.append(jnp.dot(pool, h, precision=hp))
    xg = jnp.concatenate(pooled, axis=-1)
    fw1, fb1, fw2, fb2 = params["head"]
    hh = jnp.maximum(jnp.dot(xg, fw1, precision=hp) + fb1, 0.0)
    return (jnp.dot(hh, fw2, precision=hp) + fb2).reshape(-1)


# ----------------------------------------------------------------------------
if __name__ == "__main__":
    NUM_NODES = 32       # total nodes across the batch of graphs
    NUM_FEATURES = 11    # QM9 node feature dimension
    NUM_EDGES = 64
    NUM_GRAPHS = 4

    key = jax.random.PRNGKey(0)
    kx, ke, kp = jax.random.split(key, 3)

    x = jax.random.normal(kx, (NUM_NODES, NUM_FEATURES), jnp.float32)
    edge_index = jax.random.randint(ke, (2, NUM_EDGES), 0, NUM_NODES, jnp.int32)
    # batch vector: nodes evenly assigned to NUM_GRAPHS graphs (sorted, like PyG)
    batch = jnp.sort(jnp.arange(NUM_NODES, dtype=jnp.int32) % NUM_GRAPHS)

    params = init_params(kp, NUM_FEATURES)
    packed = prepare_params(params)

    out = net_forward(x, edge_index, batch, packed, NUM_GRAPHS)
    jax.block_until_ready(out)
    assert out.shape == (NUM_GRAPHS,)

    # bf16 aggregation operands (a requested optimization) consume part of the
    # tolerance budget vs. the all-f32 reference, hence the 5e-2 tolerance.
    ref = reference_forward(x, edge_index, batch, params, NUM_GRAPHS)
    assert jnp.allclose(out, ref, rtol=5e-2, atol=5e-2), (out, ref)
    print("KERNEL_OK")
</pallas_src>

<mosaic_0001>
module attributes {stable_mosaic.version = 11 : i64} {
  func.func @fused_gin_kernel(%arg0: i32, %arg1: i32, %arg2: memref<1xi32, #tpu.memory_space<smem>>, %arg3: memref<256x128xf32, #tpu.memory_space<vmem>>, %arg4: memref<256x256xbf16, #tpu.memory_space<vmem>>, %arg5: memref<8x256xf32, #tpu.memory_space<vmem>>, %arg6: memref<1x128x128xf32, #tpu.memory_space<vmem>>, %arg7: memref<1x1x128xf32, #tpu.memory_space<vmem>>, %arg8: memref<1x128x128xf32, #tpu.memory_space<vmem>>, %arg9: memref<1x1x128xf32, #tpu.memory_space<vmem>>, %arg10: memref<1x1x128xf32, #tpu.memory_space<vmem>>, %arg11: memref<1x1x128xf32, #tpu.memory_space<vmem>>, %arg12: memref<1x128x128xf32, #tpu.memory_space<vmem>>, %arg13: memref<1x128xf32, #tpu.memory_space<vmem>>, %arg14: memref<128x128xf32, #tpu.memory_space<vmem>>, %arg15: memref<1x128xf32, #tpu.memory_space<vmem>>, %arg16: memref<8x128xf32, #tpu.memory_space<vmem>>, %arg17: memref<256x128xbf16, #tpu.memory_space<vmem>>, %arg18: memref<256x128xf32, #tpu.memory_space<vmem>>, %arg19: memref<1x128xf32, #tpu.memory_space<vmem>>, %arg20: memref<1x128xf32, #tpu.memory_space<vmem>>, %arg21: memref<8x128xf32, #tpu.memory_space<vmem>>) attributes {dimension_semantics = [#tpu.dimension_semantics<arbitrary>, #tpu.dimension_semantics<arbitrary>], iteration_bounds = array<i64: 5, 1>, scalar_prefetch = 1 : i64, scratch_operands = 5 : i64, tpu.core_type = #tpu.core_type<tc>, window_params = [{pipeline_mode = #tpu.pipeline_mode<synchronous>, transform_indices = @transform_0, window_bounds = array<i64: 256, 128>}, {transform_indices = @transform_1, window_bounds = array<i64: 256, 256>}, {pipeline_mode = #tpu.pipeline_mode<synchronous>, transform_indices = @transform_2, window_bounds = array<i64: 8, 256>}, {transform_indices = @transform_3, window_bounds = array<i64: 1, 128, 128>}, {transform_indices = @transform_4, window_bounds = array<i64: 1, 1, 128>}, {transform_indices = @transform_5, window_bounds = array<i64: 1, 128, 128>}, {transform_indices = @transform_6, window_bounds = array<i64: 1, 1, 128>}, {transform_indices = @transform_7, window_bounds = array<i64: 1, 1, 128>}, {transform_indices = @transform_8, window_bounds = array<i64: 1, 1, 128>}, {transform_indices = @transform_9, window_bounds = array<i64: 1, 128, 128>}, {pipeline_mode = #tpu.pipeline_mode<synchronous>, transform_indices = @transform_10, window_bounds = array<i64: 1, 128>}, {pipeline_mode = #tpu.pipeline_mode<synchronous>, transform_indices = @transform_11, window_bounds = array<i64: 128, 128>}, {pipeline_mode = #tpu.pipeline_mode<synchronous>, transform_indices = @transform_12, window_bounds = array<i64: 1, 128>}, {pipeline_mode = #tpu.pipeline_mode<synchronous>, transform_indices = @transform_13, window_bounds = array<i64: 8, 128>}]} {
    %c0 = arith.constant 0 : index
    %0 = memref.load %arg2[%c0] : memref<1xi32, #tpu.memory_space<smem>>
    %1 = arith.sitofp %0 : i32 to f32
    %cst = arith.constant 1.000000e+00 : f32
    %2 = arith.divf %cst, %1 : f32
    %c0_i32 = arith.constant 0 : i32
    %3 = arith.cmpi eq, %arg0, %c0_i32 : i32
    %c0_i32_0 = arith.constant 0 : i32
    %4 = arith.cmpi eq, %arg1, %c0_i32_0 : i32
    %5 = arith.andi %3, %4 : i1
    %6 = arith.extui %5 : i1 to i32
    %c0_i32_1 = arith.constant 0 : i32
    %7 = arith.cmpi ne, %6, %c0_i32_1 : i32
    scf.if %7 {
      %c0_42 = arith.constant 0 : index
      %c0_43 = arith.constant 0 : index
      %65 = vector.load %arg3[%c0_42, %c0_43] : memref<256x128xf32, #tpu.memory_space<vmem>>, vector<256x128xf32>
      %66 = arith.truncf %65 : vector<256x128xf32> to vector<256x128xbf16>
      %c0_44 = arith.constant 0 : index
      %c0_45 = arith.constant 0 : index
      %67 = vector.load %arg17[%c0_44, %c0_45] : memref<256x128xbf16, #tpu.memory_space<vmem>>, vector<256x128xbf16>
      tpu.vector_store %arg17[%c0_44, %c0_45], %66 {strides = array<i32>} : memref<256x128xbf16, #tpu.memory_space<vmem>>, vector<256x128xbf16>,
      %cst_46 = arith.constant 0.000000e+00 : f32
      %68 = vector.broadcast %cst_46 : f32 to vector<8x128xf32>
      %c0_47 = arith.constant 0 : index
      %c0_48 = arith.constant 0 : index
      %69 = vector.load %arg21[%c0_47, %c0_48] : memref<8x128xf32, #tpu.memory_space<vmem>>, vector<8x128xf32>
      tpu.vector_store %arg21[%c0_47, %c0_48], %68 {strides = array<i32>} : memref<8x128xf32, #tpu.memory_space<vmem>>, vector<8x128xf32>,
    } else {
    }
    %c0_i32_2 = arith.constant 0 : i32
    %8 = arith.cmpi eq, %arg1, %c0_i32_2 : i32
    %9 = arith.extui %8 : i1 to i32
    %c0_i32_3 = arith.constant 0 : i32
    %10 = arith.cmpi ne, %9, %c0_i32_3 : i32
    scf.if %10 {
      %cst_42 = arith.constant 0.000000e+00 : f32
      %65 = vector.broadcast %cst_42 : f32 to vector<1x128xf32>
      %c0_43 = arith.constant 0 : index
      %c0_44 = arith.constant 0 : index
      %66 = vector.load %arg19[%c0_43, %c0_44] : memref<1x128xf32, #tpu.memory_space<vmem>>, vector<1x128xf32>
      tpu.vector_store %arg19[%c0_43, %c0_44], %65 {strides = array<i32>} : memref<1x128xf32, #tpu.memory_space<vmem>>, vector<1x128xf32>,
      %cst_45 = arith.constant 0.000000e+00 : f32
      %67 = vector.broadcast %cst_45 : f32 to vector<1x128xf32>
      %c0_46 = arith.constant 0 : index
      %c0_47 = arith.constant 0 : index
      %68 = vector.load %arg20[%c0_46, %c0_47] : memref<1x128xf32, #tpu.memory_space<vmem>>, vector<1x128xf32>
      tpu.vector_store %arg20[%c0_46, %c0_47], %67 {strides = array<i32>} : memref<1x128xf32, #tpu.memory_space<vmem>>, vector<1x128xf32>,
    } else {
    }
    %c0_4 = arith.constant 0 : index
    %c0_5 = arith.constant 0 : index
    %11 = vector.load %arg4[%c0_4, %c0_5] : memref<256x256xbf16, #tpu.memory_space<vmem>>, vector<256x256xbf16>
    %c0_6 = arith.constant 0 : index
    %c0_7 = arith.constant 0 : index
    %12 = vector.load %arg17[%c0_6, %c0_7] : memref<256x128xbf16, #tpu.memory_space<vmem>>, vector<256x128xbf16>
    %cst_8 = arith.constant dense<0.000000e+00> : vector<256x128xf32>
    %13 = tpu.matmul %11, %12, %cst_8 {dimension_numbers = #tpu.dot_dimension_numbers<[1], [0], [0], [1], [0, 0, 1, 1], [], []>} : vector<256x256xbf16>, vector<256x128xbf16>, vector<256x128xf32> -> vector<256x128xf32>
    %c0_9 = arith.constant 0 : index
    %c0_10 = arith.constant 0 : index
    %c0_11 = arith.constant 0 : index
    %14 = vector.load %arg6[%c0_9, %c0_10, %c0_11] : memref<1x128x128xf32, #tpu.memory_space<vmem>>, vector<1x128x128xf32>
    %15 = vector.shape_cast %14 : vector<1x128x128xf32> to vector<128x128xf32>
    %cst_12 = arith.constant dense<0.000000e+00> : vector<256x128xf32>
    %16 = tpu.matmul %13, %15, %cst_12 {dimension_numbers = #tpu.dot_dimension_numbers<[1], [0], [0], [1], [0, 0, 1, 1], [], []>} : vector<256x128xf32>, vector<128x128xf32>, vector<256x128xf32> -> vector<256x128xf32>
    %c0_13 = arith.constant 0 : index
    %c0_14 = arith.constant 0 : index
    %c0_15 = arith.constant 0 : index
    %17 = vector.load %arg7[%c0_13, %c0_14, %c0_15] : memref<1x1x128xf32, #tpu.memory_space<vmem>>, vector<1x1x128xf32>
    %18 = vector.shape_cast %17 : vector<1x1x128xf32> to vector<1x128xf32>
    %19 = vector.broadcast %18 : vector<1x128xf32> to vector<256x128xf32>
    %20 = arith.addf %16, %19 : vector<256x128xf32>
    %cst_16 = arith.constant 0.000000e+00 : f32
    %21 = vector.broadcast %cst_16 : f32 to vector<256x128xf32>
    %22 = arith.maximumf %20, %21 : vector<256x128xf32>
    %c0_17 = arith.constant 0 : index
    %c0_18 = arith.constant 0 : index
    %c0_19 = arith.constant 0 : index
    %23 = vector.load %arg8[%c0_17, %c0_18, %c0_19] : memref<1x128x128xf32, #tpu.memory_space<vmem>>, vector<1x128x128xf32>
    %24 = vector.shape_cast %23 : vector<1x128x128xf32> to vector<128x128xf32>
    %cst_20 = arith.constant dense<0.000000e+00> : vector<256x128xf32>
    %25 = tpu.matmul %22, %24, %cst_20 {dimension_numbers = #tpu.dot_dimension_numbers<[1], [0], [0], [1], [0, 0, 1, 1], [], []>} : vector<256x128xf32>, vector<128x128xf32>, vector<256x128xf32> -> vector<256x128xf32>
    %c0_21 = arith.constant 0 : index
    %c0_22 = arith.constant 0 : index
    %c0_23 = arith.constant 0 : index
    %26 = vector.load %arg9[%c0_21, %c0_22, %c0_23] : memref<1x1x128xf32, #tpu.memory_space<vmem>>, vector<1x1x128xf32>
    %27 = vector.shape_cast %26 : vector<1x1x128xf32> to vector<1x128xf32>
    %28 = vector.broadcast %27 : vector<1x128xf32> to vector<256x128xf32>
    %29 = arith.addf %25, %28 : vector<256x128xf32>
    %cst_24 = arith.constant 0.000000e+00 : f32
    %30 = vector.broadcast %cst_24 : f32 to vector<256x128xf32>
    %31 = arith.maximumf %29, %30 : vector<256x128xf32>
    %32 = tpu.iota {dimensions = array<i32: 0>} : vector<256x1xi32>
    %c256_i32 = arith.constant 256 : i32
    %33 = arith.muli %arg1, %c256_i32 : i32
    %34 = vector.broadcast %33 : i32 to vector<256x1xi32>
    %35 = arith.addi %32, %34 : vector<256x1xi32>
    %36 = vector.broadcast %0 : i32 to vector<256x1xi32>
    %37 = arith.cmpi slt, %35, %36 : vector<256x1xi32>
    %cst_25 = arith.constant 0.000000e+00 : f32
    %38 = vector.shape_cast %37 : vector<256x1xi1> to vector<256x1xi1>
    %39 = vector.broadcast %38 : vector<256x1xi1> to vector<256x128xi1>
    %40 = vector.broadcast %cst_25 : f32 to vector<256x128xf32>
    %41 = arith.select %39, %31, %40 : vector<256x128xi1>, vector<256x128xf32>
    %c256_i32_26 = arith.constant 256 : i32
    %42 = arith.muli %arg1, %c256_i32_26 : i32
    %43 = tpu.assume_multiple %42, 256 : i32
    %44 = arith.index_cast %43 : i32 to index
    %c0_27 = arith.constant 0 : index
    %45 = vector.load %arg18[%44, %c0_27] : memref<256x128xf32, #tpu.memory_space<vmem>>, vector<256x128xf32>
    tpu.vector_store %arg18[%44, %c0_27], %41 {strides = array<i32>} : memref<256x128xf32, #tpu.memory_space<vmem>>, vector<256x128xf32>,
    %c0_28 = arith.constant 0 : index
    %c0_29 = arith.constant 0 : index
    %46 = vector.load %arg19[%c0_28, %c0_29] : memref<1x128xf32, #tpu.memory_space<vmem>>, vector<1x128xf32>
    %cst_30 = arith.constant dense<0.000000e+00> : vector<128xf32>
    %47 = vector.multi_reduction <add>, %41, %cst_30 [0] : vector<256x128xf32> to vector<128xf32>
    %48 = vector.shape_cast %47 : vector<128xf32> to vector<1x128xf32>
    %49 = arith.addf %46, %48 : vector<1x128xf32>
    %c0_31 = arith.constant 0 : index
    %c0_32 = arith.constant 0 : index
    %50 = vector.load %arg19[%c0_31, %c0_32] : memref<1x128xf32, #tpu.memory_space<vmem>>, vector<1x128xf32>
    tpu.vector_store %arg19[%c0_31, %c0_32], %49 {strides = array<i32>} : memref<1x128xf32, #tpu.memory_space<vmem>>, vector<1x128xf32>,
    %c0_33 = arith.constant 0 : index
    %c0_34 = arith.constant 0 : index
    %51 = vector.load %arg20[%c0_33, %c0_34] : memref<1x128xf32, #tpu.memory_space<vmem>>, vector<1x128xf32>
    %52 = arith.mulf %41, %41 : vector<256x128xf32>
    %cst_35 = arith.constant dense<0.000000e+00> : vector<128xf32>
    %53 = vector.multi_reduction <add>, %52, %cst_35 [0] : vector<256x128xf32> to vector<128xf32>
    %54 = vector.shape_cast %53 : vector<128xf32> to vector<1x128xf32>
    %55 = arith.addf %51, %54 : vector<1x128xf32>
    %c0_36 = arith.constant 0 : index
    %c0_37 = arith.constant 0 : index
    %56 = vector.load %arg20[%c0_36, %c0_37] : memref<1x128xf32, #tpu.memory_space<vmem>>, vector<1x128xf32>
    tpu.vector_store %arg20[%c0_36, %c0_37], %55 {strides = array<i32>} : memref<1x128xf32, #tpu.memory_space<vmem>>, vector<1x128xf32>,
    %c0_i32_38 = arith.constant 0 : i32
    %57 = arith.cmpi eq, %arg1, %c0_i32_38 : i32
    %58 = arith.extui %57 : i1 to i32
    %c0_i32_39 = arith.constant 0 : i32
    %59 = arith.cmpi ne, %58, %c0_i32_39 : i32
    scf.if %59 {
      %c0_42 = arith.constant 0 : index
      %c0_43 = arith.constant 0 : index
      %65 = vector.load %arg19[%c0_42, %c0_43] : memref<1x128xf32, #tpu.memory_space<vmem>>, vector<1x128xf32>
      %66 = vector.broadcast %2 : f32 to vector<1x128xf32>
      %67 = arith.mulf %65, %66 : vector<1x128xf32>
      %c0_44 = arith.constant 0 : index
      %c0_45 = arith.constant 0 : index
      %68 = vector.load %arg20[%c0_44, %c0_45] : memref<1x128xf32, #tpu.memory_space<vmem>>, vector<1x128xf32>
      %69 = vector.broadcast %2 : f32 to vector<1x128xf32>
      %70 = arith.mulf %68, %69 : vector<1x128xf32>
      %71 = arith.mulf %67, %67 : vector<1x128xf32>
      %72 = arith.subf %70, %71 : vector<1x128xf32>
      %cst_46 = arith.constant 0.000000e+00 : f32
      %73 = vector.broadcast %cst_46 : f32 to vector<1x128xf32>
      %74 = arith.maximumf %72, %73 : vector<1x128xf32>
      %c0_47 = arith.constant 0 : index
      %c0_48 = arith.constant 0 : index
      %c0_49 = arith.constant 0 : index
      %75 = vector.load %arg10[%c0_47, %c0_48, %c0_49] : memref<1x1x128xf32, #tpu.memory_space<vmem>>, vector<1x1x128xf32>
      %76 = vector.shape_cast %75 : vector<1x1x128xf32> to vector<1x128xf32>
      %cst_50 = arith.constant 9.99999974E-6 : f32
      %77 = vector.broadcast %cst_50 : f32 to vector<1x128xf32>
      %78 = arith.addf %74, %77 : vector<1x128xf32>
      %79 = math.rsqrt %78 : vector<1x128xf32>
      %80 = arith.mulf %76, %79 : vector<1x128xf32>
      %c0_51 = arith.constant 0 : index
      %c0_52 = arith.constant 0 : index
      %c0_53 = arith.constant 0 : index
      %81 = vector.load %arg11[%c0_51, %c0_52, %c0_53] : memref<1x1x128xf32, #tpu.memory_space<vmem>>, vector<1x1x128xf32>
      %82 = vector.shape_cast %81 : vector<1x1x128xf32> to vector<1x128xf32>
      %83 = arith.mulf %67, %80 : vector<1x128xf32>
      %84 = arith.subf %82, %83 : vector<1x128xf32>
      %c0_54 = arith.constant 0 : index
      %c0_55 = arith.constant 0 : index
      %85 = vector.load %arg18[%c0_54, %c0_55] : memref<256x128xf32, #tpu.memory_space<vmem>>, vector<256x128xf32>
      %86 = vector.broadcast %80 : vector<1x128xf32> to vector<256x128xf32>
      %87 = arith.mulf %85, %86 : vector<256x128xf32>
      %88 = vector.broadcast %84 : vector<1x128xf32> to vector<256x128xf32>
      %89 = arith.addf %87, %88 : vector<256x128xf32>
      %90 = arith.truncf %89 : vector<256x128xf32> to vector<256x128xbf16>
      %c0_56 = arith.constant 0 : index
      %c0_57 = arith.constant 0 : index
      %91 = vector.load %arg17[%c0_56, %c0_57] : memref<256x128xbf16, #tpu.memory_space<vmem>>, vector<256x128xbf16>
      tpu.vector_store %arg17[%c0_56, %c0_57], %90 {strides = array<i32>} : memref<256x128xbf16, #tpu.memory_space<vmem>>, vector<256x128xbf16>,
      %c0_58 = arith.constant 0 : index
      %c0_59 = arith.constant 0 : index
      %92 = vector.load %arg5[%c0_58, %c0_59] : memref<8x256xf32, #tpu.memory_space<vmem>>, vector<8x256xf32>
      %cst_60 = arith.constant dense<0.000000e+00> : vector<8x128xf32>
      %93 = tpu.matmul %92, %89, %cst_60 {dimension_numbers = #tpu.dot_dimension_numbers<[1], [0], [0], [1], [0, 0, 1, 1], [], []>} : vector<8x256xf32>, vector<256x128xf32>, vector<8x128xf32> -> vector<8x128xf32>
      %c0_61 = arith.constant 0 : index
      %c0_62 = arith.constant 0 : index
      %94 = vector.load %arg21[%c0_61, %c0_62] : memref<8x128xf32, #tpu.memory_space<vmem>>, vector<8x128xf32>
      %c0_63 = arith.constant 0 : index
      %c0_64 = arith.constant 0 : index
      %c0_65 = arith.constant 0 : index
      %95 = vector.load %arg12[%c0_63, %c0_64, %c0_65] : memref<1x128x128xf32, #tpu.memory_space<vmem>>, vector<1x128x128xf32>
      %96 = vector.shape_cast %95 : vector<1x128x128xf32> to vector<128x128xf32>
      %cst_66 = arith.constant dense<0.000000e+00> : vector<8x128xf32>
      %97 = tpu.matmul %93, %96, %cst_66 {dimension_numbers = #tpu.dot_dimension_numbers<[1], [0], [0], [1], [0, 0, 1, 1], [], []>} : vector<8x128xf32>, vector<128x128xf32>, vector<8x128xf32> -> vector<8x128xf32>
      %98 = arith.addf %94, %97 : vector<8x128xf32>
      %c0_67 = arith.constant 0 : index
      %c0_68 = arith.constant 0 : index
      %99 = vector.load %arg21[%c0_67, %c0_68] : memref<8x128xf32, #tpu.memory_space<vmem>>, vector<8x128xf32>
      tpu.vector_store %arg21[%c0_67, %c0_68], %98 {strides = array<i32>} : memref<8x128xf32, #tpu.memory_space<vmem>>, vector<8x128xf32>,
    } else {
    }
    %c4_i32 = arith.constant 4 : i32
    %60 = arith.cmpi eq, %arg0, %c4_i32 : i32
    %c0_i32_40 = arith.constant 0 : i32
    %61 = arith.cmpi eq, %arg1, %c0_i32_40 : i32
    %62 = arith.andi %60, %61 : i1
    %63 = arith.extui %62 : i1 to i32
    %c0_i32_41 = arith.constant 0 : i32
    %64 = arith.cmpi ne, %63, %c0_i32_41 : i32
    scf.if %64 {
      %c0_42 = arith.constant 0 : index
      %c0_43 = arith.constant 0 : index
      %65 = vector.load %arg21[%c0_42, %c0_43] : memref<8x128xf32, #tpu.memory_space<vmem>>, vector<8x128xf32>
      %c0_44 = arith.constant 0 : index
      %c0_45 = arith.constant 0 : index
      %66 = vector.load %arg13[%c0_44, %c0_45] : memref<1x128xf32, #tpu.memory_space<vmem>>, vector<1x128xf32>
      %67 = vector.broadcast %66 : vector<1x128xf32> to vector<8x128xf32>
      %68 = arith.addf %65, %67 : vector<8x128xf32>
      %cst_46 = arith.constant 0.000000e+00 : f32
      %69 = vector.broadcast %cst_46 : f32 to vector<8x128xf32>
      %70 = arith.maximumf %68, %69 : vector<8x128xf32>
      %c0_47 = arith.constant 0 : index
      %c0_48 = arith.constant 0 : index
      %71 = vector.load %arg14[%c0_47, %c0_48] : memref<128x128xf32, #tpu.memory_space<vmem>>, vector<128x128xf32>
      %cst_49 = arith.constant dense<0.000000e+00> : vector<8x128xf32>
      %72 = tpu.matmul %70, %71, %cst_49 {dimension_numbers = #tpu.dot_dimension_numbers<[1], [0], [0], [1], [0, 0, 1, 1], [], []>} : vector<8x128xf32>, vector<128x128xf32>, vector<8x128xf32> -> vector<8x128xf32>
      %c0_50 = arith.constant 0 : index
      %c0_51 = arith.constant 0 : index
      %73 = vector.load %arg15[%c0_50, %c0_51] : memref<1x128xf32, #tpu.memory_space<vmem>>, vector<1x128xf32>
      %74 = vector.broadcast %73 : vector<1x128xf32> to vector<8x128xf32>
      %75 = arith.addf %72, %74 : vector<8x128xf32>
      %c0_52 = arith.constant 0 : index
      %c0_53 = arith.constant 0 : index
      %76 = vector.load %arg16[%c0_52, %c0_53] : memref<8x128xf32, #tpu.memory_space<vmem>>, vector<8x128xf32>
      tpu.vector_store %arg16[%c0_52, %c0_53], %75 {strides = array<i32>} : memref<8x128xf32, #tpu.memory_space<vmem>>, vector<8x128xf32>,
    } else {
    }
    return
  }
  func.func @transform_0(%arg0: i32, %arg1: i32, %arg2: memref<1xi32, #tpu.memory_space<smem>>) -> (i32, i32) {
    %c0_i32 = arith.constant 0 : i32
    %c0_i32_0 = arith.constant 0 : i32
    %c0_i32_1 = arith.constant 0 : i32
    return %c0_i32, %c0_i32_0 : i32, i32
  }
  func.func @transform_1(%arg0: i32, %arg1: i32, %arg2: memref<1xi32, #tpu.memory_space<smem>>) -> (i32, i32) {
    %c0_i32 = arith.constant 0 : i32
    %c0_i32_0 = arith.constant 0 : i32
    return %arg1, %c0_i32 : i32, i32
  }
  func.func @transform_2(%arg0: i32, %arg1: i32, %arg2: memref<1xi32, #tpu.memory_space<smem>>) -> (i32, i32) {
    %c0_i32 = arith.constant 0 : i32
    %c0_i32_0 = arith.constant 0 : i32
    %c0_i32_1 = arith.constant 0 : i32
    return %c0_i32, %c0_i32_0 : i32, i32
  }
  func.func @transform_3(%arg0: i32, %arg1: i32, %arg2: memref<1xi32, #tpu.memory_space<smem>>) -> (i32, i32, i32) {
    %c0_i32 = arith.constant 0 : i32
    %c0_i32_0 = arith.constant 0 : i32
    %c0_i32_1 = arith.constant 0 : i32
    return %arg0, %c0_i32, %c0_i32_0 : i32, i32, i32
  }
  func.func @transform_4(%arg0: i32, %arg1: i32, %arg2: memref<1xi32, #tpu.memory_space<smem>>) -> (i32, i32, i32) {
    %c0_i32 = arith.constant 0 : i32
    %c0_i32_0 = arith.constant 0 : i32
    %c0_i32_1 = arith.constant 0 : i32
    return %arg0, %c0_i32, %c0_i32_0 : i32, i32, i32
  }
  func.func @transform_5(%arg0: i32, %arg1: i32, %arg2: memref<1xi32, #tpu.memory_space<smem>>) -> (i32, i32, i32) {
    %c0_i32 = arith.constant 0 : i32
    %c0_i32_0 = arith.constant 0 : i32
    %c0_i32_1 = arith.constant 0 : i32
    return %arg0, %c0_i32, %c0_i32_0 : i32, i32, i32
  }
  func.func @transform_6(%arg0: i32, %arg1: i32, %arg2: memref<1xi32, #tpu.memory_space<smem>>) -> (i32, i32, i32) {
    %c0_i32 = arith.constant 0 : i32
    %c0_i32_0 = arith.constant 0 : i32
    %c0_i32_1 = arith.constant 0 : i32
    return %arg0, %c0_i32, %c0_i32_0 : i32, i32, i32
  }
  func.func @transform_7(%arg0: i32, %arg1: i32, %arg2: memref<1xi32, #tpu.memory_space<smem>>) -> (i32, i32, i32) {
    %c0_i32 = arith.constant 0 : i32
    %c0_i32_0 = arith.constant 0 : i32
    %c0_i32_1 = arith.constant 0 : i32
    return %arg0, %c0_i32, %c0_i32_0 : i32, i32, i32
  }
  func.func @transform_8(%arg0: i32, %arg1: i32, %arg2: memref<1xi32, #tpu.memory_space<smem>>) -> (i32, i32, i32) {
    %c0_i32 = arith.constant 0 : i32
    %c0_i32_0 = arith.constant 0 : i32
    %c0_i32_1 = arith.constant 0 : i32
    return %arg0, %c0_i32, %c0_i32_0 : i32, i32, i32
  }
  func.func @transform_9(%arg0: i32, %arg1: i32, %arg2: memref<1xi32, #tpu.memory_space<smem>>) -> (i32, i32, i32) {
    %c0_i32 = arith.constant 0 : i32
    %c0_i32_0 = arith.constant 0 : i32
    %c0_i32_1 = arith.constant 0 : i32
    return %arg0, %c0_i32, %c0_i32_0 : i32, i32, i32
  }
  func.func @transform_10(%arg0: i32, %arg1: i32, %arg2: memref<1xi32, #tpu.memory_space<smem>>) -> (i32, i32) {
    %c0_i32 = arith.constant 0 : i32
    %c0_i32_0 = arith.constant 0 : i32
    %c0_i32_1 = arith.constant 0 : i32
    return %c0_i32, %c0_i32_0 : i32, i32
  }
  func.func @transform_11(%arg0: i32, %arg1: i32, %arg2: memref<1xi32, #tpu.memory_space<smem>>) -> (i32, i32) {
    %c0_i32 = arith.constant 0 : i32
    %c0_i32_0 = arith.constant 0 : i32
    %c0_i32_1 = arith.constant 0 : i32
    return %c0_i32, %c0_i32_0 : i32, i32
  }
  func.func @transform_12(%arg0: i32, %arg1: i32, %arg2: memref<1xi32, #tpu.memory_space<smem>>) -> (i32, i32) {
    %c0_i32 = arith.constant 0 : i32
    %c0_i32_0 = arith.constant 0 : i32
    %c0_i32_1 = arith.constant 0 : i32
    return %c0_i32, %c0_i32_0 : i32, i32
  }
  func.func @transform_13(%arg0: i32, %arg1: i32, %arg2: memref<1xi32, #tpu.memory_space<smem>>) -> (i32, i32) {
    %c0_i32 = arith.constant 0 : i32
    %c0_i32_0 = arith.constant 0 : i32
    %c0_i32_1 = arith.constant 0 : i32
    return %c0_i32, %c0_i32_0 : i32, i32
  }
}

</mosaic_0001>

<llo_original>
// kernel: net_forward.1
$region0: #{net_forward.1}
  #allocation0 [shape = 'u32[]', space=smem, size = 0x4, offset = 0x4, fixed_abs, tag = 'smem constant byte address 0x4 - core index']
  #allocation1 [shape = 'u32[144,128]{1,0:T(1,128)}', space=vmem, size = 0x12000, scoped, tag = 'internal scratch']
  #allocation2 [shape = 'bf16[256,128]{1,0:T(16,128)(2,1)}', space=vmem, size = 0x10000, scoped, tag = 'scratch operand']
  #allocation3 [shape = 'f32[256,128]{1,0:T(8,128)}', space=vmem, size = 0x20000, scoped, tag = 'scratch operand']
  #allocation4 [shape = 'f32[1,128]{1,0:T(1,128)}', space=vmem, size = 0x200, scoped, tag = 'scratch operand']
  #allocation5 [shape = 'f32[1,128]{1,0:T(1,128)}', space=vmem, size = 0x200, scoped, tag = 'scratch operand']
  #allocation6 [shape = 'f32[8,128]{1,0:T(8,128)}', space=vmem, size = 0x1000, scoped, tag = 'scratch operand']
  #allocation7 [shape = 's32[1]{0}', space=sflag, size = 0x4, scoped, tag = 'scoped memory for net_forward.1']
  #allocation8 [shape = 's32[1]{0:T(128)S(6)}', space=smem, size = 0x200, scoped, tag = 'prefetched SMEM operand 0']
  %s0 = inlined_call_operand.<no memory space> [shape: s32[1], index: 0, kind: input, shape index: {}]
  %s1 = inlined_call_operand.vmem [shape: f32[256,128], index: 1, kind: input, shape index: {}]
  %s2 = inlined_call_operand.vmem [shape: bf16[256,256], index: 2, kind: input, shape index: {}]
  %s3 = inlined_call_operand.vmem [shape: f32[8,256], index: 3, kind: input, shape index: {}]
  %s4 = inlined_call_operand.vmem [shape: f32[5,128,128], index: 4, kind: input, shape index: {}]
  %s5 = inlined_call_operand.vmem [shape: f32[5,1,128], index: 5, kind: input, shape index: {}]
  %s6 = inlined_call_operand.vmem [shape: f32[5,128,128], index: 6, kind: input, shape index: {}]
  %s7 = inlined_call_operand.vmem [shape: f32[5,1,128], index: 7, kind: input, shape index: {}]
  %s8 = inlined_call_operand.vmem [shape: f32[5,1,128], index: 8, kind: input, shape index: {}]
  %s9 = inlined_call_operand.vmem [shape: f32[5,1,128], index: 9, kind: input, shape index: {}]
  %s10 = inlined_call_operand.vmem [shape: f32[5,128,128], index: 10, kind: input, shape index: {}]
  %s11 = inlined_call_operand.vmem [shape: f32[1,128], index: 11, kind: input, shape index: {}]
  %s12 = inlined_call_operand.vmem [shape: f32[128,128], index: 12, kind: input, shape index: {}]
  %s13 = inlined_call_operand.vmem [shape: f32[1,128], index: 13, kind: input, shape index: {}]
  %s14 = inlined_call_operand.vmem [shape: f32[8,128], index: 14, kind: output, shape index: {}]
  %s15 = sld [smem:[#allocation0]]
  $region101: #{net_forward.1} parent=0
    _
  %s17 = ssub.s32 1, %s15
  %s18 = scalar_select 0, %s17, %s15
  %19 = sst [smem:[#allocation8]] %s0
  loop: start=0, step=1, limit=7
  $region2: #{net_forward.1} parent=0 // loop_pre_header
    _
  $region3: #{net_forward.1} parent=0 // loop_header
    %s21 = sphi 0, %s25
    %p22 = scmp.ge.s32.totalorder %s21, 7
    %s28 = sphi 0, %s40
    %s29 = sphi 0, %s36
    %s30 = sphi 0, %s28
    %s31 = sphi 0, %s29
    %s32 = sphi 0, %s30
    %s33 = sphi 0, %s31
    %s41 = sphi 0, %s41
    %s43 = sphi 0, %s41
    %s44 = sphi 0, %s43
    %s58 = sphi 0, %s44
    %s64 = sphi 0, %s66
    %s67 = sphi 0, %s64
    %s68 = sphi 0, %s67
    %s84 = sphi 0, %s68
    %s88 = sphi 0, %s88
    %s90 = sphi 0, %s88
    %s91 = sphi 0, %s90
    %s105 = sphi 0, %s91
    %s111 = sphi 0, %s113
    %s114 = sphi 0, %s111
    %s115 = sphi 0, %s114
    %s131 = sphi 0, %s115
    %s137 = sphi 0, %s139
    %s140 = sphi 0, %s137
    %s141 = sphi 0, %s140
    %s157 = sphi 0, %s141
    %s163 = sphi 0, %s165
    %s166 = sphi 0, %s163
    %s167 = sphi 0, %s166
    %s183 = sphi 0, %s167
    %s189 = sphi 0, %s191
    %s192 = sphi 0, %s189
    %s193 = sphi 0, %s192
    %s209 = sphi 0, %s193
    %s215 = sphi 0, %s217
    %s218 = sphi 0, %s215
    %s219 = sphi 0, %s218
    %s235 = sphi 0, %s219
    %s241 = sphi 0, %s243
    %s244 = sphi 0, %s241
    %s245 = sphi 0, %s244
    %s261 = sphi 0, %s245
    %s267 = sphi 0, %s269
    %s270 = sphi 0, %s267
    %s271 = sphi 0, %s270
    %s287 = sphi 0, %s271
    %s291 = sphi 0, %s291
    %s293 = sphi 0, %s291
    %s294 = sphi 0, %s293
    %s308 = sphi 0, %s294
    %s312 = sphi 0, %s312
    %s314 = sphi 0, %s312
    %s315 = sphi 0, %s314
    %s329 = sphi 0, %s315
    %s333 = sphi 0, %s333
    %s335 = sphi 0, %s333
    %s336 = sphi 0, %s335
    %s350 = sphi 0, %s336
    %s354 = sphi 0, %s354
    %s356 = sphi 0, %s354
    %s357 = sphi 0, %s356
    %s371 = sphi 0, %s357
  $region4: #{net_forward.1} parent=0 // loop_header_branch
    %24 = sbr.rel (%p22) target = $region8
  $region5: #{net_forward.1} parent=0 // loop_body
    %s26 = ssub.s32 %s21, 1
    %s27 = ssub.s32 %s21, 2
    %s34 = sadd.s32 1, %s29
    %p35 = scmp.ge.s32.totalorder %s34, 1
    %s36 = scalar_select %p35, 0, %s34
    %s37 = sadd.s32 1, %s28
    %s38 = scalar_select %p35, %s37, %s28
    %p39 = scmp.ge.s32.totalorder %s38, 5
    %s40 = scalar_select %p39, 0, %s38
    %s42 = sadd.s32 %s41, 1
    %p45 = scmp.eq.s32.totalorder %s21, 4
    %p46 = scmp.ne.s32.totalorder %s41, %s43
    %p47 = scmp.eq.s32.totalorder %s21, 0
    %p48 = por %p46, %p47
    %p49 = scmp.ne.s32.totalorder %s41, %s43
    %p50 = scmp.eq.s32.totalorder %s26, 4
    %p51 = por %p49, %p50
    %p52 = scmp.ne.s32.totalorder %s43, %s44
    %p53 = scmp.eq.s32.totalorder %s26, 0
    %p54 = por %p52, %p53
    %p55 = scmp.ne.s32.totalorder %s43, %s44
    %p56 = scmp.eq.s32.totalorder %s27, 4
    %p57 = por %p55, %p56
    %p59 = scmp.ne.s32.totalorder %s44, %s58
    %p60 = scmp.eq.s32.totalorder %s27, 0
    %p61 = por %p59, %p60
    %s62 = ssub.s32 %s29, %s36
    %p63 = scmp.eq.s32.totalorder %s62, 0
    %s65 = sadd.s32 %s64, 1
    %s66 = scalar_select %p63, %s64, %s65
    %p69 = pneg %p63
    %p70 = scmp.eq.s32.totalorder %s21, 4
    %p71 = por %p69, %p70
    %p72 = scmp.ne.s32.totalorder %s64, %s67
    %p73 = scmp.eq.s32.totalorder %s21, 0
    %p74 = por %p72, %p73
    %p75 = scmp.ne.s32.totalorder %s64, %s67
    %p76 = scmp.eq.s32.totalorder %s26, 4
    %p77 = por %p75, %p76
    %p78 = scmp.ne.s32.totalorder %s67, %s68
    %p79 = scmp.eq.s32.totalorder %s26, 0
    %p80 = por %p78, %p79
    %p81 = scmp.ne.s32.totalorder %s67, %s68
    %p82 = scmp.eq.s32.totalorder %s27, 4
    %p83 = por %p81, %p82
    %p85 = scmp.ne.s32.totalorder %s68, %s84
    %p86 = scmp.eq.s32.totalorder %s27, 0
    %p87 = por %p85, %p86
    %s89 = sadd.s32 %s88, 1
    %p92 = scmp.eq.s32.totalorder %s21, 4
    %p93 = scmp.ne.s32.totalorder %s88, %s90
    %p94 = scmp.eq.s32.totalorder %s21, 0
    %p95 = por %p93, %p94
    %p96 = scmp.ne.s32.totalorder %s88, %s90
    %p97 = scmp.eq.s32.totalorder %s26, 4
    %p98 = por %p96, %p97
    %p99 = scmp.ne.s32.totalorder %s90, %s91
    %p100 = scmp.eq.s32.totalorder %s26, 0
    %p101 = por %p99, %p100
    %p102 = scmp.ne.s32.totalorder %s90, %s91
    %p103 = scmp.eq.s32.totalorder %s27, 4
    %p104 = por %p102, %p103
    %p106 = scmp.ne.s32.totalorder %s91, %s105
    %p107 = scmp.eq.s32.totalorder %s27, 0
    %p108 = por %p106, %p107
    %s109 = ssub.s32 %s28, %s40
    %p110 = scmp.eq.s32.totalorder %s109, 0
    %s112 = sadd.s32 %s111, 1
    %s113 = scalar_select %p110, %s111, %s112
    %p116 = pneg %p110
    %p117 = scmp.eq.s32.totalorder %s21, 4
    %p118 = por %p116, %p117
    %p119 = scmp.ne.s32.totalorder %s111, %s114
    %p120 = scmp.eq.s32.totalorder %s21, 0
    %p121 = por %p119, %p120
    %p122 = scmp.ne.s32.totalorder %s111, %s114
    %p123 = scmp.eq.s32.totalorder %s26, 4
    %p124 = por %p122, %p123
    %p125 = scmp.ne.s32.totalorder %s114, %s115
    %p126 = scmp.eq.s32.totalorder %s26, 0
    %p127 = por %p125, %p126
    %p128 = scmp.ne.s32.totalorder %s114, %s115
    %p129 = scmp.eq.s32.totalorder %s27, 4
    %p130 = por %p128, %p129
    %p132 = scmp.ne.s32.totalorder %s115, %s131
    %p133 = scmp.eq.s32.totalorder %s27, 0
    %p134 = por %p132, %p133
    %s135 = ssub.s32 %s28, %s40
    %p136 = scmp.eq.s32.totalorder %s135, 0
    %s138 = sadd.s32 %s137, 1
    %s139 = scalar_select %p136, %s137, %s138
    %p142 = pneg %p136
    %p143 = scmp.eq.s32.totalorder %s21, 4
    %p144 = por %p142, %p143
    %p145 = scmp.ne.s32.totalorder %s137, %s140
    %p146 = scmp.eq.s32.totalorder %s21, 0
    %p147 = por %p145, %p146
    %p148 = scmp.ne.s32.totalorder %s137, %s140
    %p149 = scmp.eq.s32.totalorder %s26, 4
    %p150 = por %p148, %p149
    %p151 = scmp.ne.s32.totalorder %s140, %s141
    %p152 = scmp.eq.s32.totalorder %s26, 0
    %p153 = por %p151, %p152
    %p154 = scmp.ne.s32.totalorder %s140, %s141
    %p155 = scmp.eq.s32.totalorder %s27, 4
    %p156 = por %p154, %p155
    %p158 = scmp.ne.s32.totalorder %s141, %s157
    %p159 = scmp.eq.s32.totalorder %s27, 0
    %p160 = por %p158, %p159
    %s161 = ssub.s32 %s28, %s40
    %p162 = scmp.eq.s32.totalorder %s161, 0
    %s164 = sadd.s32 %s163, 1
    %s165 = scalar_select %p162, %s163, %s164
    %p168 = pneg %p162
    %p169 = scmp.eq.s32.totalorder %s21, 4
    %p170 = por %p168, %p169
    %p171 = scmp.ne.s32.totalorder %s163, %s166
    %p172 = scmp.eq.s32.totalorder %s21, 0
    %p173 = por %p171, %p172
    %p174 = scmp.ne.s32.totalorder %s163, %s166
    %p175 = scmp.eq.s32.totalorder %s26, 4
    %p176 = por %p174, %p175
    %p177 = scmp.ne.s32.totalorder %s166, %s167
    %p178 = scmp.eq.s32.totalorder %s26, 0
    %p179 = por %p177, %p178
    %p180 = scmp.ne.s32.totalorder %s166, %s167
    %p181 = scmp.eq.s32.totalorder %s27, 4
    %p182 = por %p180, %p181
    %p184 = scmp.ne.s32.totalorder %s167, %s183
    %p185 = scmp.eq.s32.totalorder %s27, 0
    %p186 = por %p184, %p185
    %s187 = ssub.s32 %s28, %s40
    %p188 = scmp.eq.s32.totalorder %s187, 0
    %s190 = sadd.s32 %s189, 1
    %s191 = scalar_select %p188, %s189, %s190
    %p194 = pneg %p188
    %p195 = scmp.eq.s32.totalorder %s21, 4
    %p196 = por %p194, %p195
    %p197 = scmp.ne.s32.totalorder %s189, %s192
    %p198 = scmp.eq.s32.totalorder %s21, 0
    %p199 = por %p197, %p198
    %p200 = scmp.ne.s32.totalorder %s189, %s192
    %p201 = scmp.eq.s32.totalorder %s26, 4
    %p202 = por %p200, %p201
    %p203 = scmp.ne.s32.totalorder %s192, %s193
    %p204 = scmp.eq.s32.totalorder %s26, 0
    %p205 = por %p203, %p204
    %p206 = scmp.ne.s32.totalorder %s192, %s193
    %p207 = scmp.eq.s32.totalorder %s27, 4
    %p208 = por %p206, %p207
    %p210 = scmp.ne.s32.totalorder %s193, %s209
    %p211 = scmp.eq.s32.totalorder %s27, 0
    %p212 = por %p210, %p211
    %s213 = ssub.s32 %s28, %s40
    %p214 = scmp.eq.s32.totalorder %s213, 0
    %s216 = sadd.s32 %s215, 1
    %s217 = scalar_select %p214, %s215, %s216
    %p220 = pneg %p214
    %p221 = scmp.eq.s32.totalorder %s21, 4
    %p222 = por %p220, %p221
    %p223 = scmp.ne.s32.totalorder %s215, %s218
    %p224 = scmp.eq.s32.totalorder %s21, 0
    %p225 = por %p223, %p224
    %p226 = scmp.ne.s32.totalorder %s215, %s218
    %p227 = scmp.eq.s32.totalorder %s26, 4
    %p228 = por %p226, %p227
    %p229 = scmp.ne.s32.totalorder %s218, %s219
    %p230 = scmp.eq.s32.totalorder %s26, 0
    %p231 = por %p229, %p230
    %p232 = scmp.ne.s32.totalorder %s218, %s219
    %p233 = scmp.eq.s32.totalorder %s27, 4
    %p234 = por %p232, %p233
    %p236 = scmp.ne.s32.totalorder %s219, %s235
    %p237 = scmp.eq.s32.totalorder %s27, 0
    %p238 = por %p236, %p237
    %s239 = ssub.s32 %s28, %s40
    %p240 = scmp.eq.s32.totalorder %s239, 0
    %s242 = sadd.s32 %s241, 1
    %s243 = scalar_select %p240, %s241, %s242
    %p246 = pneg %p240
    %p247 = scmp.eq.s32.totalorder %s21, 4
    %p248 = por %p246, %p247
    %p249 = scmp.ne.s32.totalorder %s241, %s244
    %p250 = scmp.eq.s32.totalorder %s21, 0
    %p251 = por %p249, %p250
    %p252 = scmp.ne.s32.totalorder %s241, %s244
    %p253 = scmp.eq.s32.totalorder %s26, 4
    %p254 = por %p252, %p253
    %p255 = scmp.ne.s32.totalorder %s244, %s245
    %p256 = scmp.eq.s32.totalorder %s26, 0
    %p257 = por %p255, %p256
    %p258 = scmp.ne.s32.totalorder %s244, %s245
    %p259 = scmp.eq.s32.totalorder %s27, 4
    %p260 = por %p258, %p259
    %p262 = scmp.ne.s32.totalorder %s245, %s261
    %p263 = scmp.eq.s32.totalorder %s27, 0
    %p264 = por %p262, %p263
    %s265 = ssub.s32 %s28, %s40
    %p266 = scmp.eq.s32.totalorder %s265, 0
    %s268 = sadd.s32 %s267, 1
    %s269 = scalar_select %p266, %s267, %s268
    %p272 = pneg %p266
    %p273 = scmp.eq.s32.totalorder %s21, 4
    %p274 = por %p272, %p273
    %p275 = scmp.ne.s32.totalorder %s267, %s270
    %p276 = scmp.eq.s32.totalorder %s21, 0
    %p277 = por %p275, %p276
    %p278 = scmp.ne.s32.totalorder %s267, %s270
    %p279 = scmp.eq.s32.totalorder %s26, 4
    %p280 = por %p278, %p279
    %p281 = scmp.ne.s32.totalorder %s270, %s271
    %p282 = scmp.eq.s32.totalorder %s26, 0
    %p283 = por %p281, %p282
    %p284 = scmp.ne.s32.totalorder %s270, %s271
    %p285 = scmp.eq.s32.totalorder %s27, 4
    %p286 = por %p284, %p285
    %p288 = scmp.ne.s32.totalorder %s271, %s287
    %p289 = scmp.eq.s32.totalorder %s27, 0
    %p290 = por %p288, %p289
    %s292 = sadd.s32 %s291, 1
    %p295 = scmp.eq.s32.totalorder %s21, 4
    %p296 = scmp.ne.s32.totalorder %s291, %s293
    %p297 = scmp.eq.s32.totalorder %s21, 0
    %p298 = por %p296, %p297
    %p299 = scmp.ne.s32.totalorder %s291, %s293
    %p300 = scmp.eq.s32.totalorder %s26, 4
    %p301 = por %p299, %p300
    %p302 = scmp.ne.s32.totalorder %s293, %s294
    %p303 = scmp.eq.s32.totalorder %s26, 0
    %p304 = por %p302, %p303
    %p305 = scmp.ne.s32.totalorder %s293, %s294
    %p306 = scmp.eq.s32.totalorder %s27, 4
    %p307 = por %p305, %p306
    %p309 = scmp.ne.s32.totalorder %s294, %s308
    %p310 = scmp.eq.s32.totalorder %s27, 0
    %p311 = por %p309, %p310
    %s313 = sadd.s32 %s312, 1
    %p316 = scmp.eq.s32.totalorder %s21, 4
    %p317 = scmp.ne.s32.totalorder %s312, %s314
    %p318 = scmp.eq.s32.totalorder %s21, 0
    %p319 = por %p317, %p318
    %p320 = scmp.ne.s32.totalorder %s312, %s314
    %p321 = scmp.eq.s32.totalorder %s26, 4
    %p322 = por %p320, %p321
    %p323 = scmp.ne.s32.totalorder %s314, %s315
    %p324 = scmp.eq.s32.totalorder %s26, 0
    %p325 = por %p323, %p324
    %p326 = scmp.ne.s32.totalorder %s314, %s315
    %p327 = scmp.eq.s32.totalorder %s27, 4
    %p328 = por %p326, %p327
    %p330 = scmp.ne.s32.totalorder %s315, %s329
    %p331 = scmp.eq.s32.totalorder %s27, 0
    %p332 = por %p330, %p331
    %s334 = sadd.s32 %s333, 1
    %p337 = scmp.eq.s32.totalorder %s21, 4
    %p338 = scmp.ne.s32.totalorder %s333, %s335
    %p339 = scmp.eq.s32.totalorder %s21, 0
    %p340 = por %p338, %p339
    %p341 = scmp.ne.s32.totalorder %s333, %s335
    %p342 = scmp.eq.s32.totalorder %s26, 4
    %p343 = por %p341, %p342
    %p344 = scmp.ne.s32.totalorder %s335, %s336
    %p345 = scmp.eq.s32.totalorder %s26, 0
    %p346 = por %p344, %p345
    %p347 = scmp.ne.s32.totalorder %s335, %s336
    %p348 = scmp.eq.s32.totalorder %s27, 4
    %p349 = por %p347, %p348
    %p351 = scmp.ne.s32.totalorder %s336, %s350
    %p352 = scmp.eq.s32.totalorder %s27, 0
    %p353 = por %p351, %p352
    %s355 = sadd.s32 %s354, 1
    %p358 = scmp.eq.s32.totalorder %s21, 4
    %p359 = scmp.ne.s32.totalorder %s354, %s356
    %p360 = scmp.eq.s32.totalorder %s21, 0
    %p361 = por %p359, %p360
    %p362 = scmp.ne.s32.totalorder %s354, %s356
    %p363 = scmp.eq.s32.totalorder %s26, 4
    %p364 = por %p362, %p363
    %p365 = scmp.ne.s32.totalorder %s356, %s357
    %p366 = scmp.eq.s32.totalorder %s26, 0
    %p367 = por %p365, %p366
    %p368 = scmp.ne.s32.totalorder %s356, %s357
    %p369 = scmp.eq.s32.totalorder %s27, 4
    %p370 = por %p368, %p369
    %p372 = scmp.ne.s32.totalorder %s357, %s371
    %p373 = scmp.eq.s32.totalorder %s27, 0
    %p374 = por %p372, %p373
    %p375 = scmp.le.s32.totalorder 1, %s21
    %p376 = scmp.lt.s32.totalorder %s21, 6
    %p377 = pnand %p375, %p376
    %p378 = pneg %p377
    // Predicated region
    $region9: #{net_forward.1} parent=5 // pred_check
      _
    $region10: #{net_forward.1} parent=5 // pred_check_branch
      %380 = sbr.rel (%p377) target = $region12
    $region11: #{net_forward.1} parent=5 // pred_region
      %s381 = ssub.s32 %s21, 1
      // Predicated region
      $region13: #{net_forward.1} parent=11 // pred_check
        %p382 = pneg %p54
      $region14: #{net_forward.1} parent=11 // pred_check_branch
        %384 = sbr.rel (%p382) target = $region16
      $region15: #{net_forward.1} parent=11 // pred_region
        _
      $region16: #{net_forward.1} parent=11 // pred_fallthru
        _
      // Predicated region
      $region17: #{net_forward.1} parent=11 // pred_check
        %p385 = pneg %p80
      $region18: #{net_forward.1} parent=11 // pred_check_branch
        %387 = sbr.rel (%p385) target = $region20
      $region19: #{net_forward.1} parent=11 // pred_region
        %s388 = smul.u32 32, %s31
        %p389 = scmp.lt.s32.totalorder %s388, 31
        %s390 = scalar_select %p389, %s388, 31
        %s391 = smul.addr %s390, 2
        %s392 = smul.addr %s391, 4
        %s393 = scalar_lea.vmem %s2, %s392
        %s394 = smul.u32 32, %s31
      $region20: #{net_forward.1} parent=11 // pred_fallthru
        _
      // Predicated region
      $region21: #{net_forward.1} parent=11 // pred_check
        %p395 = pneg %p101
      $region22: #{net_forward.1} parent=11 // pred_check_branch
        %397 = sbr.rel (%p395) target = $region24
      $region23: #{net_forward.1} parent=11 // pred_region
        _
      $region24: #{net_forward.1} parent=11 // pred_fallthru
        _
      // Predicated region
      $region25: #{net_forward.1} parent=11 // pred_check
        %p398 = pneg %p304
      $region26: #{net_forward.1} parent=11 // pred_check_branch
        %400 = sbr.rel (%p398) target = $region28
      $region27: #{net_forward.1} parent=11 // pred_region
        _
      $region28: #{net_forward.1} parent=11 // pred_fallthru
        _
      // Predicated region
      $region29: #{net_forward.1} parent=11 // pred_check
        %p401 = pneg %p325
      $region30: #{net_forward.1} parent=11 // pred_check_branch
        %403 = sbr.rel (%p401) target = $region32
      $region31: #{net_forward.1} parent=11 // pred_region
        _
      $region32: #{net_forward.1} parent=11 // pred_fallthru
        _
      // Predicated region
      $region33: #{net_forward.1} parent=11 // pred_check
        %p404 = pneg %p346
      $region34: #{net_forward.1} parent=11 // pred_check_branch
        %406 = sbr.rel (%p404) target = $region36
      $region35: #{net_forward.1} parent=11 // pred_region
        _
      $region36: #{net_forward.1} parent=11 // pred_fallthru
        _
    $region12: #{net_forward.1} parent=5 // pred_fallthru
      _
    %p407 = scmp.lt.s32.totalorder %s21, 5
    // Predicated region
    $region37: #{net_forward.1} parent=5 // pred_check
      %p408 = pneg %p407
    $region38: #{net_forward.1} parent=5 // pred_check_branch
      %410 = sbr.rel (%p408) target = $region40
    $region39: #{net_forward.1} parent=5 // pred_region
      // Predicated region
      $region41: #{net_forward.1} parent=39 // pred_check
        %p411 = pneg %p121
      $region42: #{net_forward.1} parent=39 // pred_check_branch
        %413 = sbr.rel (%p411) target = $region44
      $region43: #{net_forward.1} parent=39 // pred_region
        %p414 = scmp.lt.s32.totalorder %s28, 4
        %s415 = scalar_select %p414, %s28, 4
        %s416 = smul.addr %s415, 16
        %s417 = smul.addr %s416, 8
        %s418 = scalar_lea.vmem %s4, %s417
      $region44: #{net_forward.1} parent=39 // pred_fallthru
        _
      // Predicated region
      $region45: #{net_forward.1} parent=39 // pred_check
        %p419 = pneg %p147
      $region46: #{net_forward.1} parent=39 // pred_check_branch
        %421 = sbr.rel (%p419) target = $region48
      $region47: #{net_forward.1} parent=39 // pred_region
        %p422 = scmp.lt.s32.totalorder %s28, 4
        %s423 = scalar_select %p422, %s28, 4
        %s424 = scalar_lea.vmem %s5, %s423
      $region48: #{net_forward.1} parent=39 // pred_fallthru
        _
      // Predicated region
      $region49: #{net_forward.1} parent=39 // pred_check
        %p425 = pneg %p173
      $region50: #{net_forward.1} parent=39 // pred_check_branch
        %427 = sbr.rel (%p425) target = $region52
      $region51: #{net_forward.1} parent=39 // pred_region
        %p428 = scmp.lt.s32.totalorder %s28, 4
        %s429 = scalar_select %p428, %s28, 4
        %s430 = smul.addr %s429, 16
        %s431 = smul.addr %s430, 8
        %s432 = scalar_lea.vmem %s6, %s431
      $region52: #{net_forward.1} parent=39 // pred_fallthru
        _
      // Predicated region
      $region53: #{net_forward.1} parent=39 // pred_check
        %p433 = pneg %p199
      $region54: #{net_forward.1} parent=39 // pred_check_branch
        %435 = sbr.rel (%p433) target = $region56
      $region55: #{net_forward.1} parent=39 // pred_region
        %p436 = scmp.lt.s32.totalorder %s28, 4
        %s437 = scalar_select %p436, %s28, 4
        %s438 = scalar_lea.vmem %s7, %s437
      $region56: #{net_forward.1} parent=39 // pred_fallthru
        _
      // Predicated region
      $region57: #{net_forward.1} parent=39 // pred_check
        %p439 = pneg %p225
      $region58: #{net_forward.1} parent=39 // pred_check_branch
        %441 = sbr.rel (%p439) target = $region60
      $region59: #{net_forward.1} parent=39 // pred_region
        %p442 = scmp.lt.s32.totalorder %s28, 4
        %s443 = scalar_select %p442, %s28, 4
        %s444 = scalar_lea.vmem %s8, %s443
      $region60: #{net_forward.1} parent=39 // pred_fallthru
        _
      // Predicated region
      $region61: #{net_forward.1} parent=39 // pred_check
        %p445 = pneg %p251
      $region62: #{net_forward.1} parent=39 // pred_check_branch
        %447 = sbr.rel (%p445) target = $region64
      $region63: #{net_forward.1} parent=39 // pred_region
        %p448 = scmp.lt.s32.totalorder %s28, 4
        %s449 = scalar_select %p448, %s28, 4
        %s450 = scalar_lea.vmem %s9, %s449
      $region64: #{net_forward.1} parent=39 // pred_fallthru
        _
      // Predicated region
      $region65: #{net_forward.1} parent=39 // pred_check
        %p451 = pneg %p277
      $region66: #{net_forward.1} parent=39 // pred_check_branch
        %453 = sbr.rel (%p451) target = $region68
      $region67: #{net_forward.1} parent=39 // pred_region
        %p454 = scmp.lt.s32.totalorder %s28, 4
        %s455 = scalar_select %p454, %s28, 4
        %s456 = smul.addr %s455, 16
        %s457 = smul.addr %s456, 8
        %s458 = scalar_lea.vmem %s10, %s457
      $region68: #{net_forward.1} parent=39 // pred_fallthru
        _
    $region40: #{net_forward.1} parent=5 // pred_fallthru
      _
    %p459 = scmp.le.s32.totalorder 1, %s21
    %p460 = scmp.lt.s32.totalorder %s21, 6
    %p461 = pnand %p459, %p460
    %p462 = pneg %p461
    // Predicated region
    $region69: #{net_forward.1} parent=5 // pred_check
      _
    $region70: #{net_forward.1} parent=5 // pred_check_branch
      %464 = sbr.rel (%p461) target = $region72
    $region71: #{net_forward.1} parent=5 // pred_region
      %s465 = ssub.s32 %s21, 1
      %p466 = pneg %p54
      %p467 = pneg %p51
      %s468 = smul.u32 32, %s31
      %p469 = scmp.lt.s32.totalorder %s468, 31
      %s470 = scalar_select %p469, %s468, 31
      %s471 = smul.addr %s470, 2
      %s472 = smul.addr %s471, 4
      %s473 = scalar_lea.vmem %s2, %s472
      %p474 = pneg %p80
      %p475 = pneg %p77
      %p476 = pneg %p101
      %p477 = pneg %p98
      %p478 = scmp.lt.s32.totalorder %s30, 4
      %s479 = scalar_select %p478, %s30, 4
      %s480 = smul.addr %s479, 16
      %s481 = smul.addr %s480, 8
      %s482 = scalar_lea.vmem %s4, %s481
      %p483 = pneg %p127
      %p484 = pneg %p124
      %p485 = scmp.lt.s32.totalorder %s30, 4
      %s486 = scalar_select %p485, %s30, 4
      %s487 = scalar_lea.vmem %s5, %s486
      %p488 = pneg %p153
      %p489 = pneg %p150
      %p490 = scmp.lt.s32.totalorder %s30, 4
      %s491 = scalar_select %p490, %s30, 4
      %s492 = smul.addr %s491, 16
      %s493 = smul.addr %s492, 8
      %s494 = scalar_lea.vmem %s6, %s493
      %p495 = pneg %p179
      %p496 = pneg %p176
      %p497 = scmp.lt.s32.totalorder %s30, 4
      %s498 = scalar_select %p497, %s30, 4
      %s499 = scalar_lea.vmem %s7, %s498
      %p500 = pneg %p205
      %p501 = pneg %p202
      %p502 = scmp.lt.s32.totalorder %s30, 4
      %s503 = scalar_select %p502, %s30, 4
      %s504 = scalar_lea.vmem %s8, %s503
      %p505 = pneg %p231
      %p506 = pneg %p228
      %p507 = scmp.lt.s32.totalorder %s30, 4
      %s508 = scalar_select %p507, %s30, 4
      %s509 = scalar_lea.vmem %s9, %s508
      %p510 = pneg %p257
      %p511 = pneg %p254
      %p512 = scmp.lt.s32.totalorder %s30, 4
      %s513 = scalar_select %p512, %s30, 4
      %s514 = smul.addr %s513, 16
      %s515 = smul.addr %s514, 8
      %s516 = scalar_lea.vmem %s10, %s515
      %p517 = pneg %p283
      %p518 = pneg %p280
      %p519 = pneg %p304
      %p520 = pneg %p301
      %p521 = pneg %p325
      %p522 = pneg %p322
      %p523 = pneg %p346
      %p524 = pneg %p343
      %p525 = pneg %p367
      %p526 = pneg %p364
      %s527 = smul.u32 32, %s31
      %p528 = scmp.lt.s32.totalorder %s527, 31
      %s529 = scalar_select %p528, %s527, 31
      %s530 = smul.addr %s529, 2
      %s531 = smul.addr %s530, 4
      %s532 = scalar_lea.vmem %s2, %s531
      %s533 = smul.u32 32, %s31
      %p534 = scmp.lt.s32.totalorder %s30, 4
      %s535 = scalar_select %p534, %s30, 4
      %s536 = smul.addr %s535, 16
      %s537 = smul.addr %s536, 8
      %s538 = scalar_lea.vmem %s4, %s537
      %p539 = scmp.lt.s32.totalorder %s30, 4
      %s540 = scalar_select %p539, %s30, 4
      %s541 = scalar_lea.vmem %s5, %s540
      %p542 = scmp.lt.s32.totalorder %s30, 4
      %s543 = scalar_select %p542, %s30, 4
      %s544 = smul.addr %s543, 16
      %s545 = smul.addr %s544, 8
      %s546 = scalar_lea.vmem %s6, %s545
      %p547 = scmp.lt.s32.totalorder %s30, 4
      %s548 = scalar_select %p547, %s30, 4
      %s549 = scalar_lea.vmem %s7, %s548
      %p550 = scmp.lt.s32.totalorder %s30, 4
      %s551 = scalar_select %p550, %s30, 4
      %s552 = scalar_lea.vmem %s8, %s551
      %p553 = scmp.lt.s32.totalorder %s30, 4
      %s554 = scalar_select %p553, %s30, 4
      %s555 = scalar_lea.vmem %s9, %s554
      %p556 = scmp.lt.s32.totalorder %s30, 4
      %s557 = scalar_select %p556, %s30, 4
      %s558 = smul.addr %s557, 16
      %s559 = smul.addr %s558, 8
      %s560 = scalar_lea.vmem %s10, %s559
      %s562 = sld [smem:[#allocation8]]
      %s563 = scvt.s32.f32 %s562
      %v564 = vstv %s563
      %v565 = vrcp.pop %v564
      %s566 = vtos %v565
      %p567 = scmp.eq.s32.totalorder %s30, 0
      %p568 = scmp.eq.s32.totalorder %s31, 0
      %p569 = pnand %p567, %p568
      %p570 = pneg %p569
      // Predicated region
      $region73: #{net_forward.1} parent=71 // pred_check
        _
      $region74: #{net_forward.1} parent=71 // pred_check_branch
        %572 = sbr.rel (%p569) target = $region76
      $region75: #{net_forward.1} parent=71 // pred_region
        %v573 = vld [vmem:[%s1] sm:$0xff]
        %v574 = vld [vmem:[%s1 + $0x8] sm:$0xff]
        %v575 = vld [vmem:[%s1 + $0x10] sm:$0xff]
        %v576 = vld [vmem:[%s1 + $0x18] sm:$0xff]
        %v577 = vld [vmem:[%s1 + $0x20] sm:$0xff]
        %v578 = vld [vmem:[%s1 + $0x28] sm:$0xff]
        %v579 = vld [vmem:[%s1 + $0x30] sm:$0xff]
        %v580 = vld [vmem:[%s1 + $0x38] sm:$0xff]
        %v581 = vld [vmem:[%s1 + $0x40] sm:$0xff]
        %v582 = vld [vmem:[%s1 + $0x48] sm:$0xff]
        %v583 = vld [vmem:[%s1 + $0x50] sm:$0xff]
        %v584 = vld [vmem:[%s1 + $0x58] sm:$0xff]
        %v585 = vld [vmem:[%s1 + $0x60] sm:$0xff]
        %v586 = vld [vmem:[%s1 + $0x68] sm:$0xff]
        %v587 = vld [vmem:[%s1 + $0x70] sm:$0xff]
        %v588 = vld [vmem:[%s1 + $0x78] sm:$0xff]
        %v589 = vld [vmem:[%s1 + $0x80] sm:$0xff]
        %v590 = vld [vmem:[%s1 + $0x88] sm:$0xff]
        %v591 = vld [vmem:[%s1 + $0x90] sm:$0xff]
        %v592 = vld [vmem:[%s1 + $0x98] sm:$0xff]
        %v593 = vld [vmem:[%s1 + $0xa0] sm:$0xff]
        %v594 = vld [vmem:[%s1 + $0xa8] sm:$0xff]
        %v595 = vld [vmem:[%s1 + $0xb0] sm:$0xff]
        %v596 = vld [vmem:[%s1 + $0xb8] sm:$0xff]
        %v597 = vld [vmem:[%s1 + $0xc0] sm:$0xff]
        %v598 = vld [vmem:[%s1 + $0xc8] sm:$0xff]
        %v599 = vld [vmem:[%s1 + $0xd0] sm:$0xff]
        %v600 = vld [vmem:[%s1 + $0xd8] sm:$0xff]
        %v601 = vld [vmem:[%s1 + $0xe0] sm:$0xff]
        %v602 = vld [vmem:[%s1 + $0xe8] sm:$0xff]
        %v603 = vld [vmem:[%s1 + $0xf0] sm:$0xff]
        %v604 = vld [vmem:[%s1 + $0xf8] sm:$0xff]
        %v605 = vpack.c.bf16 %v574, %v573
        %v606 = vpack.c.bf16 %v576, %v575
        %v607 = vpack.c.bf16 %v578, %v577
        %v608 = vpack.c.bf16 %v580, %v579
        %v609 = vpack.c.bf16 %v582, %v581
        %v610 = vpack.c.bf16 %v584, %v583
        %v611 = vpack.c.bf16 %v586, %v585
        %v612 = vpack.c.bf16 %v588, %v587
        %v613 = vpack.c.bf16 %v590, %v589
        %v614 = vpack.c.bf16 %v592, %v591
        %v615 = vpack.c.bf16 %v594, %v593
        %v616 = vpack.c.bf16 %v596, %v595
        %v617 = vpack.c.bf16 %v598, %v597
        %v618 = vpack.c.bf16 %v600, %v599
        %v619 = vpack.c.bf16 %v602, %v601
        %v620 = vpack.c.bf16 %v604, %v603
        %621 = vst [vmem:[#allocation2] sm:$0xff] %v605
        %622 = vst [vmem:[#allocation2 + $0x8] sm:$0xff] %v606
        %623 = vst [vmem:[#allocation2 + $0x10] sm:$0xff] %v607
        %624 = vst [vmem:[#allocation2 + $0x18] sm:$0xff] %v608
        %625 = vst [vmem:[#allocation2 + $0x20] sm:$0xff] %v609
        %626 = vst [vmem:[#allocation2 + $0x28] sm:$0xff] %v610
        %627 = vst [vmem:[#allocation2 + $0x30] sm:$0xff] %v611
        %628 = vst [vmem:[#allocation2 + $0x38] sm:$0xff] %v612
        %629 = vst [vmem:[#allocation2 + $0x40] sm:$0xff] %v613
        %630 = vst [vmem:[#allocation2 + $0x48] sm:$0xff] %v614
        %631 = vst [vmem:[#allocation2 + $0x50] sm:$0xff] %v615
        %632 = vst [vmem:[#allocation2 + $0x58] sm:$0xff] %v616
        %633 = vst [vmem:[#allocation2 + $0x60] sm:$0xff] %v617
        %634 = vst [vmem:[#allocation2 + $0x68] sm:$0xff] %v618
        %635 = vst [vmem:[#allocation2 + $0x70] sm:$0xff] %v619
        %636 = vst [vmem:[#allocation2 + $0x78] sm:$0xff] %v620
        %637 = vst [vmem:[#allocation6] sm:$0xff] 0.0
      $region76: #{net_forward.1} parent=71 // pred_fallthru
        _
      // Predicated region
      $region77: #{net_forward.1} parent=71 // pred_check
        %p638 = pneg %p568
      $region78: #{net_forward.1} parent=71 // pred_check_branch
        %640 = sbr.rel (%p638) target = $region80
      $region79: #{net_forward.1} parent=71 // pred_region
        %641 = vst [vmem:[#allocation4] sm:$0x1] 0.0
        %642 = vst [vmem:[#allocation5] sm:$0x1] 0.0
      $region80: #{net_forward.1} parent=71 // pred_fallthru
        _
      %v643 = vld [vmem:[%s532] sm:$0xff]
      %v644 = vld [vmem:[%s532 + $0x8] sm:$0xff]
      %v645 = vld [vmem:[%s532 + $0x10] sm:$0xff]
      %v646 = vld [vmem:[%s532 + $0x18] sm:$0xff]
      %v647 = vld [vmem:[%s532 + $0x20] sm:$0xff]
      %v648 = vld [vmem:[%s532 + $0x28] sm:$0xff]
      %v649 = vld [vmem:[%s532 + $0x30] sm:$0xff]
      %v650 = vld [vmem:[%s532 + $0x38] sm:$0xff]
      %v651 = vld [vmem:[%s532 + $0x40] sm:$0xff]
      %v652 = vld [vmem:[%s532 + $0x48] sm:$0xff]
      %v653 = vld [vmem:[%s532 + $0x50] sm:$0xff]
      %v654 = vld [vmem:[%s532 + $0x58] sm:$0xff]
      %v655 = vld [vmem:[%s532 + $0x60] sm:$0xff]
      %v656 = vld [vmem:[%s532 + $0x68] sm:$0xff]
      %v657 = vld [vmem:[%s532 + $0x70] sm:$0xff]
      %v658 = vld [vmem:[%s532 + $0x78] sm:$0xff]
      %v659 = vld [vmem:[%s532 + $0x80] sm:$0xff]
      %v660 = vld [vmem:[%s532 + $0x88] sm:$0xff]
      %v661 = vld [vmem:[%s532 + $0x90] sm:$0xff]
      %v662 = vld [vmem:[%s532 + $0x98] sm:$0xff]
      %v663 = vld [vmem:[%s532 + $0xa0] sm:$0xff]
      %v664 = vld [vmem:[%s532 + $0xa8] sm:$0xff]
      %v665 = vld [vmem:[%s532 + $0xb0] sm:$0xff]
      %v666 = vld [vmem:[%s532 + $0xb8] sm:$0xff]
      %v667 = vld [vmem:[%s532 + $0xc0] sm:$0xff]
      %v668 = vld [vmem:[%s532 + $0xc8] sm:$0xff]
      %v669 = vld [vmem:[%s532 + $0xd0] sm:$0xff]
      %v670 = vld [vmem:[%s532 + $0xd8] sm:$0xff]
      %v671 = vld [vmem:[%s532 + $0xe0] sm:$0xff]
      %v672 = vld [vmem:[%s532 + $0xe8] sm:$0xff]
      %v673 = vld [vmem:[%s532 + $0xf0] sm:$0xff]
      %v674 = vld [vmem:[%s532 + $0xf8] sm:$0xff]
      %v675 = vld [vmem:[#allocation2] sm:$0xff]
      %v676 = vld [vmem:[#allocation2 + $0x8] sm:$0xff]
      %v677 = vld [vmem:[#allocation2 + $0x10] sm:$0xff]
      %v678 = vld [vmem:[#allocation2 + $0x18] sm:$0xff]
      %v679 = vld [vmem:[#allocation2 + $0x20] sm:$0xff]
      %v680 = vld [vmem:[#allocation2 + $0x28] sm:$0xff]
      %v681 = vld [vmem:[#allocation2 + $0x30] sm:$0xff]
      %v682 = vld [vmem:[#allocation2 + $0x38] sm:$0xff]
      %v683 = vld [vmem:[#allocation2 + $0x40] sm:$0xff]
      %v684 = vld [vmem:[#allocation2 + $0x48] sm:$0xff]
      %v685 = vld [vmem:[#allocation2 + $0x50] sm:$0xff]
      %v686 = vld [vmem:[#allocation2 + $0x58] sm:$0xff]
      %v687 = vld [vmem:[#allocation2 + $0x60] sm:$0xff]
      %v688 = vld [vmem:[#allocation2 + $0x68] sm:$0xff]
      %v689 = vld [vmem:[#allocation2 + $0x70] sm:$0xff]
      %v690 = vld [vmem:[#allocation2 + $0x78] sm:$0xff]
      %v723 = vunpack.c.l.b16 %v643
      %v724 = vunpack.c.h.b16 %v643
      %v725 = vunpack.c.l.b16 %v644
      %v726 = vunpack.c.h.b16 %v644
      %v727 = vunpack.c.l.b16 %v645
      %v728 = vunpack.c.h.b16 %v645
      %v729 = vunpack.c.l.b16 %v646
      %v730 = vunpack.c.h.b16 %v646
      %v731 = vunpack.c.l.b16 %v647
      %v732 = vunpack.c.h.b16 %v647
      %v733 = vunpack.c.l.b16 %v648
      %v734 = vunpack.c.h.b16 %v648
      %v735 = vunpack.c.l.b16 %v649
      %v736 = vunpack.c.h.b16 %v649
      %v737 = vunpack.c.l.b16 %v650
      %v738 = vunpack.c.h.b16 %v650
      %v739 = vunpack.c.l.b16 %v651
      %v740 = vunpack.c.h.b16 %v651
      %v741 = vunpack.c.l.b16 %v652
      %v742 = vunpack.c.h.b16 %v652
      %v743 = vunpack.c.l.b16 %v653
      %v744 = vunpack.c.h.b16 %v653
      %v745 = vunpack.c.l.b16 %v654
      %v746 = vunpack.c.h.b16 %v654
      %v747 = vunpack.c.l.b16 %v655
      %v748 = vunpack.c.h.b16 %v655
      %v749 = vunpack.c.l.b16 %v656
      %v750 = vunpack.c.h.b16 %v656
      %v751 = vunpack.c.l.b16 %v657
      %v752 = vunpack.c.h.b16 %v657
      %v753 = vunpack.c.l.b16 %v658
      %v754 = vunpack.c.h.b16 %v658
      %v755 = vunpack.c.l.b16 %v659
      %v756 = vunpack.c.h.b16 %v659
      %v757 = vunpack.c.l.b16 %v660
      %v758 = vunpack.c.h.b16 %v660
      %v759 = vunpack.c.l.b16 %v661
      %v760 = vunpack.c.h.b16 %v661
      %v761 = vunpack.c.l.b16 %v662
      %v762 = vunpack.c.h.b16 %v662
      %v763 = vunpack.c.l.b16 %v663
      %v764 = vunpack.c.h.b16 %v663
      %v765 = vunpack.c.l.b16 %v664
      %v766 = vunpack.c.h.b16 %v664
      %v767 = vunpack.c.l.b16 %v665
      %v768 = vunpack.c.h.b16 %v665
      %v769 = vunpack.c.l.b16 %v666
      %v770 = vunpack.c.h.b16 %v666
      %v771 = vunpack.c.l.b16 %v667
      %v772 = vunpack.c.h.b16 %v667
      %v773 = vunpack.c.l.b16 %v668
      %v774 = vunpack.c.h.b16 %v668
      %v775 = vunpack.c.l.b16 %v669
      %v776 = vunpack.c.h.b16 %v669
      %v777 = vunpack.c.l.b16 %v670
      %v778 = vunpack.c.h.b16 %v670
      %v779 = vunpack.c.l.b16 %v671
      %v780 = vunpack.c.h.b16 %v671
      %v781 = vunpack.c.l.b16 %v672
      %v782 = vunpack.c.h.b16 %v672
      %v783 = vunpack.c.l.b16 %v673
      %v784 = vunpack.c.h.b16 %v673
      %v785 = vunpack.c.l.b16 %v674
      %v786 = vunpack.c.h.b16 %v674
      %v787 = vpack.c.b16 %v725, %v723
      %v788 = vpack.c.b16 %v726, %v724
      %v789 = vpack.c.b16 %v729, %v727
      %v790 = vpack.c.b16 %v730, %v728
      %v791 = vpack.c.b16 %v733, %v731
      %v792 = vpack.c.b16 %v734, %v732
      %v793 = vpack.c.b16 %v737, %v735
      %v794 = vpack.c.b16 %v738, %v736
      %v795 = vpack.c.b16 %v741, %v739
      %v796 = vpack.c.b16 %v742, %v740
      %v797 = vpack.c.b16 %v745, %v743
      %v798 = vpack.c.b16 %v746, %v744
      %v799 = vpack.c.b16 %v749, %v747
      %v800 = vpack.c.b16 %v750, %v748
      %v801 = vpack.c.b16 %v753, %v751
      %v802 = vpack.c.b16 %v754, %v752
      %v803 = vpack.c.b16 %v757, %v755
      %v804 = vpack.c.b16 %v758, %v756
      %v805 = vpack.c.b16 %v761, %v759
      %v806 = vpack.c.b16 %v762, %v760
      %v807 = vpack.c.b16 %v765, %v763
      %v808 = vpack.c.b16 %v766, %v764
      %v809 = vpack.c.b16 %v769, %v767
      %v810 = vpack.c.b16 %v770, %v768
      %v811 = vpack.c.b16 %v773, %v771
      %v812 = vpack.c.b16 %v774, %v772
      %v813 = vpack.c.b16 %v777, %v775
      %v814 = vpack.c.b16 %v778, %v776
      %v815 = vpack.c.b16 %v781, %v779
      %v816 = vpack.c.b16 %v782, %v780
      %v817 = vpack.c.b16 %v785, %v783
      %v818 = vpack.c.b16 %v786, %v784
      %851 = vmatprep.subr.bf16.mxu0 0
      %852 = vmatpush1.bf16.msra.mxu0 %v675
      %853 = vmatprep.subr.bf16.mxu0 0
      %854 = vmatpush1.bf16.msra.mxu0 %v676
      %855 = vmatprep.subr.bf16.mxu0 0
      %856 = vmatpush1.bf16.msra.mxu0 %v677
      %857 = vmatprep.subr.bf16.mxu0 0
      %858 = vmatpush1.bf16.msra.mxu0 %v678
      %859 = vmatprep.subr.bf16.mxu0 0
      %860 = vmatpush1.bf16.msra.mxu0 %v679
      %861 = vmatprep.subr.bf16.mxu0 0
      %862 = vmatpush1.bf16.msra.mxu0 %v680
      %863 = vmatprep.subr.bf16.mxu0 0
      %864 = vmatpush1.bf16.msra.mxu0 %v681
      %865 = vmatprep.subr.bf16.mxu0 0
      %866 = vmatpush1.bf16.msra.mxu0 %v682
      %867 = vmatprep.subr.bf16.mxu0 0
      %868 = vmatpush1.bf16.msra.mxu0 %v683
      %869 = vmatprep.subr.bf16.mxu0 0
      %870 = vmatpush1.bf16.msra.mxu0 %v684
      %871 = vmatprep.subr.bf16.mxu0 0
      %872 = vmatpush1.bf16.msra.mxu0 %v685
      %873 = vmatprep.subr.bf16.mxu0 0
      %874 = vmatpush1.bf16.msra.mxu0 %v686
      %875 = vmatprep.subr.bf16.mxu0 0
      %876 = vmatpush1.bf16.msra.mxu0 %v687
      %877 = vmatprep.subr.bf16.mxu0 0
      %878 = vmatpush1.bf16.msra.mxu0 %v688
      %879 = vmatprep.subr.bf16.mxu0 0
      %880 = vmatpush1.bf16.msra.mxu0 %v689
      %881 = vmatprep.subr.bf16.mxu0 0
      %882 = vmatpush1.bf16.msra.mxu0 %v690
      %883 = vmatprep.mubr.bf16.mxu0 %v788
      %884 = vmatmul.mubr.bf16.gmra.mrb[0].mxu0 %v787
      %v885 = vpop.f32.mrb[0].mxu0
      %v886 = vadd.f32 0.0, %v885
      %v887 = vpop.f32.mrb[0].mxu0
      %v888 = vpop.f32.mrb[0].mxu0
      %v889 = vadd.f32 0.0, %v888
      %v890 = vpop.f32.mrb[0].mxu0
      %891 = vmatprep.mubr.bf16.mxu0 %v790
      %892 = vmatmul.mubr.bf16.gmra.mrb[0].mxu0 %v789
      %v893 = vpop.f32.mrb[0].mxu0
      %v894 = vadd.f32 0.0, %v893
      %v895 = vpop.f32.mrb[0].mxu0
      %v896 = vpop.f32.mrb[0].mxu0
      %v897 = vadd.f32 0.0, %v896
      %v898 = vpop.f32.mrb[0].mxu0
      %899 = vmatprep.mubr.bf16.mxu0 %v792
      %900 = vmatmul.mubr.bf16.gmra.mrb[0].mxu0 %v791
      %v901 = vpop.f32.mrb[0].mxu0
      %v902 = vadd.f32 0.0, %v901
      %v903 = vpop.f32.mrb[0].mxu0
      %v904 = vpop.f32.mrb[0].mxu0
      %v905 = vadd.f32 0.0, %v904
      %v906 = vpop.f32.mrb[0].mxu0
      %907 = vmatprep.mubr.bf16.mxu0 %v794
      %908 = vmatmul.mubr.bf16.gmra.mrb[0].mxu0 %v793
      %v909 = vpop.f32.mrb[0].mxu0
      %v910 = vadd.f32 0.0, %v909
      %v911 = vpop.f32.mrb[0].mxu0
      %v912 = vpop.f32.mrb[0].mxu0
      %v913 = vadd.f32 0.0, %v912
      %v914 = vpop.f32.mrb[0].mxu0
      %915 = vmatprep.mubr.bf16.mxu0 %v796
      %916 = vmatmul.mubr.bf16.gmra.mrb[0].mxu0 %v795
      %v917 = vpop.f32.mrb[0].mxu0
      %v918 = vadd.f32 0.0, %v917
      %v919 = vpop.f32.mrb[0].mxu0
      %v920 = vpop.f32.mrb[0].mxu0
      %v921 = vadd.f32 0.0, %v920
      %v922 = vpop.f32.mrb[0].mxu0
      %923 = vmatprep.mubr.bf16.mxu0 %v798
      %924 = vmatmul.mubr.bf16.gmra.mrb[0].mxu0 %v797
      %v925 = vpop.f32.mrb[0].mxu0
      %v926 = vadd.f32 0.0, %v925
      %v927 = vpop.f32.mrb[0].mxu0
      %v928 = vpop.f32.mrb[0].mxu0
      %v929 = vadd.f32 0.0, %v928
      %v930 = vpop.f32.mrb[0].mxu0
      %931 = vmatprep.mubr.bf16.mxu0 %v800
      %932 = vmatmul.mubr.bf16.gmra.mrb[0].mxu0 %v799
      %v933 = vpop.f32.mrb[0].mxu0
      %v934 = vadd.f32 0.0, %v933
      %v935 = vpop.f32.mrb[0].mxu0
      %v936 = vpop.f32.mrb[0].mxu0
      %v937 = vadd.f32 0.0, %v936
      %v938 = vpop.f32.mrb[0].mxu0
      %939 = vmatprep.mubr.bf16.mxu0 %v802
      %940 = vmatmul.mubr.bf16.gmra.mrb[0].mxu0 %v801
      %v941 = vpop.f32.mrb[0].mxu0
      %v942 = vadd.f32 0.0, %v941
      %v943 = vpop.f32.mrb[0].mxu0
      %v944 = vpop.f32.mrb[0].mxu0
      %v945 = vadd.f32 0.0, %v944
      %v946 = vpop.f32.mrb[0].mxu0
      %947 = vmatprep.mubr.bf16.mxu0 %v804
      %948 = vmatmul.mubr.bf16.gmra.mrb[0].mxu0 %v803
      %v949 = vpop.f32.mrb[0].mxu0
      %v950 = vadd.f32 0.0, %v949
      %v951 = vpop.f32.mrb[0].mxu0
      %v952 = vpop.f32.mrb[0].mxu0
      %v953 = vadd.f32 0.0, %v952
      %v954 = vpop.f32.mrb[0].mxu0
      %955 = vmatprep.mubr.bf16.mxu0 %v806
      %956 = vmatmul.mubr.bf16.gmra.mrb[0].mxu0 %v805
      %v957 = vpop.f32.mrb[0].mxu0
      %v958 = vadd.f32 0.0, %v957
      %v959 = vpop.f32.mrb[0].mxu0
      %v960 = vpop.f32.mrb[0].mxu0
      %v961 = vadd.f32 0.0, %v960
      %v962 = vpop.f32.mrb[0].mxu0
      %963 = vmatprep.mubr.bf16.mxu0 %v808
      %964 = vmatmul.mubr.bf16.gmra.mrb[0].mxu0 %v807
      %v965 = vpop.f32.mrb[0].mxu0
      %v966 = vadd.f32 0.0, %v965
      %v967 = vpop.f32.mrb[0].mxu0
      %v968 = vpop.f32.mrb[0].mxu0
      %v969 = vadd.f32 0.0, %v968
      %v970 = vpop.f32.mrb[0].mxu0
      %971 = vmatprep.mubr.bf16.mxu0 %v810
      %972 = vmatmul.mubr.bf16.gmra.mrb[0].mxu0 %v809
      %v973 = vpop.f32.mrb[0].mxu0
      %v974 = vadd.f32 0.0, %v973
      %v975 = vpop.f32.mrb[0].mxu0
      %v976 = vpop.f32.mrb[0].mxu0
      %v977 = vadd.f32 0.0, %v976
      %v978 = vpop.f32.mrb[0].mxu0
      %979 = vmatprep.mubr.bf16.mxu0 %v812
      %980 = vmatmul.mubr.bf16.gmra.mrb[0].mxu0 %v811
      %v981 = vpop.f32.mrb[0].mxu0
      %v982 = vadd.f32 0.0, %v981
      %v983 = vpop.f32.mrb[0].mxu0
      %v984 = vpop.f32.mrb[0].mxu0
      %v985 = vadd.f32 0.0, %v984
      %v986 = vpop.f32.mrb[0].mxu0
      %987 = vmatprep.mubr.bf16.mxu0 %v814
      %988 = vmatmul.mubr.bf16.gmra.mrb[0].mxu0 %v813
      %v989 = vpop.f32.mrb[0].mxu0
      %v990 = vadd.f32 0.0, %v989
      %v991 = vpop.f32.mrb[0].mxu0
      %v992 = vpop.f32.mrb[0].mxu0
      %v993 = vadd.f32 0.0, %v992
      %v994 = vpop.f32.mrb[0].mxu0
      %995 = vmatprep.mubr.bf16.mxu0 %v816
      %996 = vmatmul.mubr.bf16.gmra.mrb[0].mxu0 %v815
      %v997 = vpop.f32.mrb[0].mxu0
      %v998 = vadd.f32 0.0, %v997
      %v999 = vpop.f32.mrb[0].mxu0
      %v1000 = vpop.f32.mrb[0].mxu0
      %v1001 = vadd.f32 0.0, %v1000
      %v1002 = vpop.f32.mrb[0].mxu0
      %1003 = vmatprep.mubr.bf16.mxu0 %v818
      %1004 = vmatmul.mubr.bf16.gmra.mrb[0].mxu0 %v817
      %v1005 = vpop.f32.mrb[0].mxu0
      %v1006 = vadd.f32 0.0, %v1005
      %v1007 = vpop.f32.mrb[0].mxu0
      %v1008 = vpop.f32.mrb[0].mxu0
      %v1009 = vadd.f32 0.0, %v1008
      %v1010 = vpop.f32.mrb[0].mxu0
      %1011 = vdwg.mxu0
      %v1012 = vld [vmem:[%s538] sm:$0xff]
      %v1013 = vld [vmem:[%s538 + $0x8] sm:$0xff]
      %v1014 = vld [vmem:[%s538 + $0x10] sm:$0xff]
      %v1015 = vld [vmem:[%s538 + $0x18] sm:$0xff]
      %v1016 = vld [vmem:[%s538 + $0x20] sm:$0xff]
      %v1017 = vld [vmem:[%s538 + $0x28] sm:$0xff]
      %v1018 = vld [vmem:[%s538 + $0x30] sm:$0xff]
      %v1019 = vld [vmem:[%s538 + $0x38] sm:$0xff]
      %v1020 = vld [vmem:[%s538 + $0x40] sm:$0xff]
      %v1021 = vld [vmem:[%s538 + $0x48] sm:$0xff]
      %v1022 = vld [vmem:[%s538 + $0x50] sm:$0xff]
      %v1023 = vld [vmem:[%s538 + $0x58] sm:$0xff]
      %v1024 = vld [vmem:[%s538 + $0x60] sm:$0xff]
      %v1025 = vld [vmem:[%s538 + $0x68] sm:$0xff]
      %v1026 = vld [vmem:[%s538 + $0x70] sm:$0xff]
      %v1027 = vld [vmem:[%s538 + $0x78] sm:$0xff]
      %v1028 = vld [vmem:[%s541] sm:$0x1]
      %v1030 = vlaneseq
      %v1031 = vshrl.u32 %v1030, 7
      %v1032 = vsub.s32 0, %v1031
      %v1033 = vrot.slane %v1028, %v1032
      %1035 = vmatprep.subr.mxu0 0.0
      %1036 = vmatpush1.msra.mxu0 %v1012
      %1037 = vmatprep.subr.mxu0 0.0
      %1038 = vmatpush1.msra.mxu0 %v1013
      %1039 = vmatprep.subr.mxu0 0.0
      %1040 = vmatpush1.msra.mxu0 %v1014
      %1041 = vmatprep.subr.mxu0 0.0
      %1042 = vmatpush1.msra.mxu0 %v1015
      %1043 = vmatprep.subr.mxu0 0.0
      %1044 = vmatpush1.msra.mxu0 %v1016
      %1045 = vmatprep.subr.mxu0 0.0
      %1046 = vmatpush1.msra.mxu0 %v1017
      %1047 = vmatprep.subr.mxu0 0.0
      %1048 = vmatpush1.msra.mxu0 %v1018
      %1049 = vmatprep.subr.mxu0 0.0
      %1050 = vmatpush1.msra.mxu0 %v1019
      %1051 = vmatprep.subr.mxu0 0.0
      %1052 = vmatpush1.msra.mxu0 %v1020
      %1053 = vmatprep.subr.mxu0 0.0
      %1054 = vmatpush1.msra.mxu0 %v1021
      %1055 = vmatprep.subr.mxu0 0.0
      %1056 = vmatpush1.msra.mxu0 %v1022
      %1057 = vmatprep.subr.mxu0 0.0
      %1058 = vmatpush1.msra.mxu0 %v1023
      %1059 = vmatprep.subr.mxu0 0.0
      %1060 = vmatpush1.msra.mxu0 %v1024
      %1061 = vmatprep.subr.mxu0 0.0
      %1062 = vmatpush1.msra.mxu0 %v1025
      %1063 = vmatprep.subr.mxu0 0.0
      %1064 = vmatpush1.msra.mxu0 %v1026
      %1065 = vmatprep.subr.mxu0 0.0
      %1066 = vmatpush1.msra.mxu0 %v1027
      %1067 = vmatprep.subr.mxu0 0.0
      %1068 = vmatpush1.msra.mxu0 0.0
      %1069 = vmatprep.subr.mxu0 0.0
      %1070 = vmatpush1.msra.mxu0 0.0
      %1071 = vmatprep.subr.mxu0 0.0
      %1072 = vmatpush1.msra.mxu0 0.0
      %1073 = vmatprep.subr.mxu0 0.0
      %1074 = vmatpush1.msra.mxu0 0.0
      %1075 = vmatprep.subr.mxu0 0.0
      %1076 = vmatpush1.msra.mxu0 0.0
      %1077 = vmatprep.subr.mxu0 0.0
      %1078 = vmatpush1.msra.mxu0 0.0
      %1079 = vmatprep.subr.mxu0 0.0
      %1080 = vmatpush1.msra.mxu0 0.0
      %1081 = vmatprep.subr.mxu0 0.0
      %1082 = vmatpush1.msra.mxu0 0.0
      %1083 = vmatprep.subr.mxu0 0.0
      %1084 = vmatpush1.msra.mxu0 0.0
      %1085 = vmatprep.subr.mxu0 0.0
      %1086 = vmatpush1.msra.mxu0 0.0
      %1087 = vmatprep.subr.mxu0 0.0
      %1088 = vmatpush1.msra.mxu0 0.0
      %1089 = vmatprep.subr.mxu0 0.0
      %1090 = vmatpush1.msra.mxu0 0.0
      %1091 = vmatprep.subr.mxu0 0.0
      %1092 = vmatpush1.msra.mxu0 0.0
      %1093 = vmatprep.subr.mxu0 0.0
      %1094 = vmatpush1.msra.mxu0 0.0
      %1095 = vmatprep.subr.mxu0 0.0
      %1096 = vmatpush1.msra.mxu0 0.0
      %1097 = vmatprep.subr.mxu0 0.0
      %1098 = vmatpush1.msra.mxu0 0.0
      %1099 = vmatprep.mubr.f32.mxu0 0.0
      %1100 = vmatmul.mubr.f32.gmra.mrb[0].mxu0 %v886
      %v1101 = vpop.f32.mrb[0].mxu0
      %v1102 = vadd.f32 %v1033, %v1101
      %v1103 = vpop.f32.mrb[0].mxu0
      %1104 = vmatprep.mubr.f32.mxu0 0.0
      %1105 = vmatmul.mubr.f32.gmra.mrb[0].mxu0 %v889
      %v1106 = vpop.f32.mrb[0].mxu0
      %v1107 = vadd.f32 %v1033, %v1106
      %v1108 = vpop.f32.mrb[0].mxu0
      %1109 = vmatprep.mubr.f32.mxu0 0.0
      %1110 = vmatmul.mubr.f32.gmra.mrb[0].mxu0 %v894
      %v1111 = vpop.f32.mrb[0].mxu0
      %v1112 = vadd.f32 %v1033, %v1111
      %v1113 = vpop.f32.mrb[0].mxu0
      %1114 = vmatprep.mubr.f32.mxu0 0.0
      %1115 = vmatmul.mubr.f32.gmra.mrb[0].mxu0 %v897
      %v1116 = vpop.f32.mrb[0].mxu0
      %v1117 = vadd.f32 %v1033, %v1116
      %v1118 = vpop.f32.mrb[0].mxu0
      %1119 = vmatprep.mubr.f32.mxu0 0.0
      %1120 = vmatmul.mubr.f32.gmra.mrb[0].mxu0 %v902
      %v1121 = vpop.f32.mrb[0].mxu0
      %v1122 = vadd.f32 %v1033, %v1121
      %v1123 = vpop.f32.mrb[0].mxu0
      %1124 = vmatprep.mubr.f32.mxu0 0.0
      %1125 = vmatmul.mubr.f32.gmra.mrb[0].mxu0 %v905
      %v1126 = vpop.f32.mrb[0].mxu0
      %v1127 = vadd.f32 %v1033, %v1126
      %v1128 = vpop.f32.mrb[0].mxu0
      %1129 = vmatprep.mubr.f32.mxu0 0.0
      %1130 = vmatmul.mubr.f32.gmra.mrb[0].mxu0 %v910
      %v1131 = vpop.f32.mrb[0].mxu0
      %v1132 = vadd.f32 %v1033, %v1131
      %v1133 = vpop.f32.mrb[0].mxu0
      %1134 = vmatprep.mubr.f32.mxu0 0.0
      %1135 = vmatmul.mubr.f32.gmra.mrb[0].mxu0 %v913
      %v1136 = vpop.f32.mrb[0].mxu0
      %v1137 = vadd.f32 %v1033, %v1136
      %v1138 = vpop.f32.mrb[0].mxu0
      %1139 = vmatprep.mubr.f32.mxu0 0.0
      %1140 = vmatmul.mubr.f32.gmra.mrb[0].mxu0 %v918
      %v1141 = vpop.f32.mrb[0].mxu0
      %v1142 = vadd.f32 %v1033, %v1141
      %v1143 = vpop.f32.mrb[0].mxu0
      %1144 = vmatprep.mubr.f32.mxu0 0.0
      %1145 = vmatmul.mubr.f32.gmra.mrb[0].mxu0 %v921
      %v1146 = vpop.f32.mrb[0].mxu0
      %v1147 = vadd.f32 %v1033, %v1146
      %v1148 = vpop.f32.mrb[0].mxu0
      %1149 = vmatprep.mubr.f32.mxu0 0.0
      %1150 = vmatmul.mubr.f32.gmra.mrb[0].mxu0 %v926
      %v1151 = vpop.f32.mrb[0].mxu0
      %v1152 = vadd.f32 %v1033, %v1151
      %v1153 = vpop.f32.mrb[0].mxu0
      %1154 = vmatprep.mubr.f32.mxu0 0.0
      %1155 = vmatmul.mubr.f32.gmra.mrb[0].mxu0 %v929
      %v1156 = vpop.f32.mrb[0].mxu0
      %v1157 = vadd.f32 %v1033, %v1156
      %v1158 = vpop.f32.mrb[0].mxu0
      %1159 = vmatprep.mubr.f32.mxu0 0.0
      %1160 = vmatmul.mubr.f32.gmra.mrb[0].mxu0 %v934
      %v1161 = vpop.f32.mrb[0].mxu0
      %v1162 = vadd.f32 %v1033, %v1161
      %v1163 = vpop.f32.mrb[0].mxu0
      %1164 = vmatprep.mubr.f32.mxu0 0.0
      %1165 = vmatmul.mubr.f32.gmra.mrb[0].mxu0 %v937
      %v1166 = vpop.f32.mrb[0].mxu0
      %v1167 = vadd.f32 %v1033, %v1166
      %v1168 = vpop.f32.mrb[0].mxu0
      %1169 = vmatprep.mubr.f32.mxu0 0.0
      %1170 = vmatmul.mubr.f32.gmra.mrb[0].mxu0 %v942
      %v1171 = vpop.f32.mrb[0].mxu0
      %v1172 = vadd.f32 %v1033, %v1171
      %v1173 = vpop.f32.mrb[0].mxu0
      %1174 = vmatprep.mubr.f32.mxu0 0.0
      %1175 = vmatmul.mubr.f32.gmra.mrb[0].mxu0 %v945
      %v1176 = vpop.f32.mrb[0].mxu0
      %v1177 = vadd.f32 %v1033, %v1176
      %v1178 = vpop.f32.mrb[0].mxu0
      %1179 = vmatprep.mubr.f32.mxu0 0.0
      %1180 = vmatmul.mubr.f32.gmra.mrb[0].mxu0 %v950
      %v1181 = vpop.f32.mrb[0].mxu0
      %v1182 = vadd.f32 %v1033, %v1181
      %v1183 = vpop.f32.mrb[0].mxu0
      %1184 = vmatprep.mubr.f32.mxu0 0.0
      %1185 = vmatmul.mubr.f32.gmra.mrb[0].mxu0 %v953
      %v1186 = vpop.f32.mrb[0].mxu0
      %v1187 = vadd.f32 %v1033, %v1186
      %v1188 = vpop.f32.mrb[0].mxu0
      %1189 = vmatprep.mubr.f32.mxu0 0.0
      %1190 = vmatmul.mubr.f32.gmra.mrb[0].mxu0 %v958
      %v1191 = vpop.f32.mrb[0].mxu0
      %v1192 = vadd.f32 %v1033, %v1191
      %v1193 = vpop.f32.mrb[0].mxu0
      %1194 = vmatprep.mubr.f32.mxu0 0.0
      %1195 = vmatmul.mubr.f32.gmra.mrb[0].mxu0 %v961
      %v1196 = vpop.f32.mrb[0].mxu0
      %v1197 = vadd.f32 %v1033, %v1196
      %v1198 = vpop.f32.mrb[0].mxu0
      %1199 = vmatprep.mubr.f32.mxu0 0.0
      %1200 = vmatmul.mubr.f32.gmra.mrb[0].mxu0 %v966
      %v1201 = vpop.f32.mrb[0].mxu0
      %v1202 = vadd.f32 %v1033, %v1201
      %v1203 = vpop.f32.mrb[0].mxu0
      %1204 = vmatprep.mubr.f32.mxu0 0.0
      %1205 = vmatmul.mubr.f32.gmra.mrb[0].mxu0 %v969
      %v1206 = vpop.f32.mrb[0].mxu0
      %v1207 = vadd.f32 %v1033, %v1206
      %v1208 = vpop.f32.mrb[0].mxu0
      %1209 = vmatprep.mubr.f32.mxu0 0.0
      %1210 = vmatmul.mubr.f32.gmra.mrb[0].mxu0 %v974
      %v1211 = vpop.f32.mrb[0].mxu0
      %v1212 = vadd.f32 %v1033, %v1211
      %v1213 = vpop.f32.mrb[0].mxu0
      %1214 = vmatprep.mubr.f32.mxu0 0.0
      %1215 = vmatmul.mubr.f32.gmra.mrb[0].mxu0 %v977
      %v1216 = vpop.f32.mrb[0].mxu0
      %v1217 = vadd.f32 %v1033, %v1216
      %v1218 = vpop.f32.mrb[0].mxu0
      %1219 = vmatprep.mubr.f32.mxu0 0.0
      %1220 = vmatmul.mubr.f32.gmra.mrb[0].mxu0 %v982
      %v1221 = vpop.f32.mrb[0].mxu0
      %v1222 = vadd.f32 %v1033, %v1221
      %v1223 = vpop.f32.mrb[0].mxu0
      %1224 = vmatprep.mubr.f32.mxu0 0.0
      %1225 = vmatmul.mubr.f32.gmra.mrb[0].mxu0 %v985
      %v1226 = vpop.f32.mrb[0].mxu0
      %v1227 = vadd.f32 %v1033, %v1226
      %v1228 = vpop.f32.mrb[0].mxu0
      %1229 = vmatprep.mubr.f32.mxu0 0.0
      %1230 = vmatmul.mubr.f32.gmra.mrb[0].mxu0 %v990
      %v1231 = vpop.f32.mrb[0].mxu0
      %v1232 = vadd.f32 %v1033, %v1231
      %v1233 = vpop.f32.mrb[0].mxu0
      %1234 = vmatprep.mubr.f32.mxu0 0.0
      %1235 = vmatmul.mubr.f32.gmra.mrb[0].mxu0 %v993
      %v1236 = vpop.f32.mrb[0].mxu0
      %v1237 = vadd.f32 %v1033, %v1236
      %v1238 = vpop.f32.mrb[0].mxu0
      %1239 = vmatprep.mubr.f32.mxu0 0.0
      %1240 = vmatmul.mubr.f32.gmra.mrb[0].mxu0 %v998
      %v1241 = vpop.f32.mrb[0].mxu0
      %v1242 = vadd.f32 %v1033, %v1241
      %v1243 = vpop.f32.mrb[0].mxu0
      %1244 = vmatprep.mubr.f32.mxu0 0.0
      %1245 = vmatmul.mubr.f32.gmra.mrb[0].mxu0 %v1001
      %v1246 = vpop.f32.mrb[0].mxu0
      %v1247 = vadd.f32 %v1033, %v1246
      %v1248 = vpop.f32.mrb[0].mxu0
      %1249 = vmatprep.mubr.f32.mxu0 0.0
      %1250 = vmatmul.mubr.f32.gmra.mrb[0].mxu0 %v1006
      %v1251 = vpop.f32.mrb[0].mxu0
      %v1252 = vadd.f32 %v1033, %v1251
      %v1253 = vpop.f32.mrb[0].mxu0
      %1254 = vmatprep.mubr.f32.mxu0 0.0
      %1255 = vmatmul.mubr.f32.gmra.mrb[0].mxu0 %v1009
      %v1256 = vpop.f32.mrb[0].mxu0
      %v1257 = vadd.f32 %v1033, %v1256
      %v1258 = vpop.f32.mrb[0].mxu0
      %1259 = vdwg.mxu0
      %v1260 = vmax.f32 %v1102, 0.0
      %v1261 = vmax.f32 %v1107, 0.0
      %v1262 = vmax.f32 %v1112, 0.0
      %v1263 = vmax.f32 %v1117, 0.0
      %v1264 = vmax.f32 %v1122, 0.0
      %v1265 = vmax.f32 %v1127, 0.0
      %v1266 = vmax.f32 %v1132, 0.0
      %v1267 = vmax.f32 %v1137, 0.0
      %v1268 = vmax.f32 %v1142, 0.0
      %v1269 = vmax.f32 %v1147, 0.0
      %v1270 = vmax.f32 %v1152, 0.0
      %v1271 = vmax.f32 %v1157, 0.0
      %v1272 = vmax.f32 %v1162, 0.0
      %v1273 = vmax.f32 %v1167, 0.0
      %v1274 = vmax.f32 %v1172, 0.0
      %v1275 = vmax.f32 %v1177, 0.0
      %v1276 = vmax.f32 %v1182, 0.0
      %v1277 = vmax.f32 %v1187, 0.0
      %v1278 = vmax.f32 %v1192, 0.0
      %v1279 = vmax.f32 %v1197, 0.0
      %v1280 = vmax.f32 %v1202, 0.0
      %v1281 = vmax.f32 %v1207, 0.0
      %v1282 = vmax.f32 %v1212, 0.0
      %v1283 = vmax.f32 %v1217, 0.0
      %v1284 = vmax.f32 %v1222, 0.0
      %v1285 = vmax.f32 %v1227, 0.0
      %v1286 = vmax.f32 %v1232, 0.0
      %v1287 = vmax.f32 %v1237, 0.0
      %v1288 = vmax.f32 %v1242, 0.0
      %v1289 = vmax.f32 %v1247, 0.0
      %v1290 = vmax.f32 %v1252, 0.0
      %v1291 = vmax.f32 %v1257, 0.0
      %v1292 = vld [vmem:[%s546] sm:$0xff]
      %v1293 = vld [vmem:[%s546 + $0x8] sm:$0xff]
      %v1294 = vld [vmem:[%s546 + $0x10] sm:$0xff]
      %v1295 = vld [vmem:[%s546 + $0x18] sm:$0xff]
      %v1296 = vld [vmem:[%s546 + $0x20] sm:$0xff]
      %v1297 = vld [vmem:[%s546 + $0x28] sm:$0xff]
      %v1298 = vld [vmem:[%s546 + $0x30] sm:$0xff]
      %v1299 = vld [vmem:[%s546 + $0x38] sm:$0xff]
      %v1300 = vld [vmem:[%s546 + $0x40] sm:$0xff]
      %v1301 = vld [vmem:[%s546 + $0x48] sm:$0xff]
      %v1302 = vld [vmem:[%s546 + $0x50] sm:$0xff]
      %v1303 = vld [vmem:[%s546 + $0x58] sm:$0xff]
      %v1304 = vld [vmem:[%s546 + $0x60] sm:$0xff]
      %v1305 = vld [vmem:[%s546 + $0x68] sm:$0xff]
      %v1306 = vld [vmem:[%s546 + $0x70] sm:$0xff]
      %v1307 = vld [vmem:[%s546 + $0x78] sm:$0xff]
      %v1308 = vld [vmem:[%s549] sm:$0x1]
      %v1310 = vlaneseq
      %v1311 = vshrl.u32 %v1310, 7
      %v1312 = vsub.s32 0, %v1311
      %v1313 = vrot.slane %v1308, %v1312
      %1315 = vmatprep.subr.mxu0 0.0
      %1316 = vmatpush1.msra.mxu0 %v1292
      %1317 = vmatprep.subr.mxu0 0.0
      %1318 = vmatpush1.msra.mxu0 %v1293
      %1319 = vmatprep.subr.mxu0 0.0
      %1320 = vmatpush1.msra.mxu0 %v1294
      %1321 = vmatprep.subr.mxu0 0.0
      %1322 = vmatpush1.msra.mxu0 %v1295
      %1323 = vmatprep.subr.mxu0 0.0
      %1324 = vmatpush1.msra.mxu0 %v1296
      %1325 = vmatprep.subr.mxu0 0.0
      %1326 = vmatpush1.msra.mxu0 %v1297
      %1327 = vmatprep.subr.mxu0 0.0
      %1328 = vmatpush1.msra.mxu0 %v1298
      %1329 = vmatprep.subr.mxu0 0.0
      %1330 = vmatpush1.msra.mxu0 %v1299
      %1331 = vmatprep.subr.mxu0 0.0
      %1332 = vmatpush1.msra.mxu0 %v1300
      %1333 = vmatprep.subr.mxu0 0.0
      %1334 = vmatpush1.msra.mxu0 %v1301
      %1335 = vmatprep.subr.mxu0 0.0
      %1336 = vmatpush1.msra.mxu0 %v1302
      %1337 = vmatprep.subr.mxu0 0.0
      %1338 = vmatpush1.msra.mxu0 %v1303
      %1339 = vmatprep.subr.mxu0 0.0
      %1340 = vmatpush1.msra.mxu0 %v1304
      %1341 = vmatprep.subr.mxu0 0.0
      %1342 = vmatpush1.msra.mxu0 %v1305
      %1343 = vmatprep.subr.mxu0 0.0
      %1344 = vmatpush1.msra.mxu0 %v1306
      %1345 = vmatprep.subr.mxu0 0.0
      %1346 = vmatpush1.msra.mxu0 %v1307
      %1347 = vmatprep.subr.mxu0 0.0
      %1348 = vmatpush1.msra.mxu0 0.0
      %1349 = vmatprep.subr.mxu0 0.0
      %1350 = vmatpush1.msra.mxu0 0.0
      %1351 = vmatprep.subr.mxu0 0.0
      %1352 = vmatpush1.msra.mxu0 0.0
      %1353 = vmatprep.subr.mxu0 0.0
      %1354 = vmatpush1.msra.mxu0 0.0
      %1355 = vmatprep.subr.mxu0 0.0
      %1356 = vmatpush1.msra.mxu0 0.0
      %1357 = vmatprep.subr.mxu0 0.0
      %1358 = vmatpush1.msra.mxu0 0.0
      %1359 = vmatprep.subr.mxu0 0.0
      %1360 = vmatpush1.msra.mxu0 0.0
      %1361 = vmatprep.subr.mxu0 0.0
      %1362 = vmatpush1.msra.mxu0 0.0
      %1363 = vmatprep.subr.mxu0 0.0
      %1364 = vmatpush1.msra.mxu0 0.0
      %1365 = vmatprep.subr.mxu0 0.0
      %1366 = vmatpush1.msra.mxu0 0.0
      %1367 = vmatprep.subr.mxu0 0.0
      %1368 = vmatpush1.msra.mxu0 0.0
      %1369 = vmatprep.subr.mxu0 0.0
      %1370 = vmatpush1.msra.mxu0 0.0
      %1371 = vmatprep.subr.mxu0 0.0
      %1372 = vmatpush1.msra.mxu0 0.0
      %1373 = vmatprep.subr.mxu0 0.0
      %1374 = vmatpush1.msra.mxu0 0.0
      %1375 = vmatprep.subr.mxu0 0.0
      %1376 = vmatpush1.msra.mxu0 0.0
      %1377 = vmatprep.subr.mxu0 0.0
      %1378 = vmatpush1.msra.mxu0 0.0
      %1379 = vmatprep.mubr.f32.mxu0 0.0
      %1380 = vmatmul.mubr.f32.gmra.mrb[0].mxu0 %v1260
      %v1381 = vpop.f32.mrb[0].mxu0
      %v1382 = vadd.f32 %v1313, %v1381
      %v1383 = vpop.f32.mrb[0].mxu0
      %1384 = vmatprep.mubr.f32.mxu0 0.0
      %1385 = vmatmul.mubr.f32.gmra.mrb[0].mxu0 %v1261
      %v1386 = vpop.f32.mrb[0].mxu0
      %v1387 = vadd.f32 %v1313, %v1386
      %v1388 = vpop.f32.mrb[0].mxu0
      %1389 = vmatprep.mubr.f32.mxu0 0.0
      %1390 = vmatmul.mubr.f32.gmra.mrb[0].mxu0 %v1262
      %v1391 = vpop.f32.mrb[0].mxu0
      %v1392 = vadd.f32 %v1313, %v1391
      %v1393 = vpop.f32.mrb[0].mxu0
      %1394 = vmatprep.mubr.f32.mxu0 0.0
      %1395 = vmatmul.mubr.f32.gmra.mrb[0].mxu0 %v1263
      %v1396 = vpop.f32.mrb[0].mxu0
      %v1397 = vadd.f32 %v1313, %v1396
      %v1398 = vpop.f32.mrb[0].mxu0
      %1399 = vmatprep.mubr.f32.mxu0 0.0
      %1400 = vmatmul.mubr.f32.gmra.mrb[0].mxu0 %v1264
      %v1401 = vpop.f32.mrb[0].mxu0
      %v1402 = vadd.f32 %v1313, %v1401
      %v1403 = vpop.f32.mrb[0].mxu0
      %1404 = vmatprep.mubr.f32.mxu0 0.0
      %1405 = vmatmul.mubr.f32.gmra.mrb[0].mxu0 %v1265
      %v1406 = vpop.f32.mrb[0].mxu0
      %v1407 = vadd.f32 %v1313, %v1406
      %v1408 = vpop.f32.mrb[0].mxu0
      %1409 = vmatprep.mubr.f32.mxu0 0.0
      %1410 = vmatmul.mubr.f32.gmra.mrb[0].mxu0 %v1266
      %v1411 = vpop.f32.mrb[0].mxu0
      %v1412 = vadd.f32 %v1313, %v1411
      %v1413 = vpop.f32.mrb[0].mxu0
      %1414 = vmatprep.mubr.f32.mxu0 0.0
      %1415 = vmatmul.mubr.f32.gmra.mrb[0].mxu0 %v1267
      %v1416 = vpop.f32.mrb[0].mxu0
      %v1417 = vadd.f32 %v1313, %v1416
      %v1418 = vpop.f32.mrb[0].mxu0
      %1419 = vmatprep.mubr.f32.mxu0 0.0
      %1420 = vmatmul.mubr.f32.gmra.mrb[0].mxu0 %v1268
      %v1421 = vpop.f32.mrb[0].mxu0
      %v1422 = vadd.f32 %v1313, %v1421
      %v1423 = vpop.f32.mrb[0].mxu0
      %1424 = vmatprep.mubr.f32.mxu0 0.0
      %1425 = vmatmul.mubr.f32.gmra.mrb[0].mxu0 %v1269
      %v1426 = vpop.f32.mrb[0].mxu0
      %v1427 = vadd.f32 %v1313, %v1426
      %v1428 = vpop.f32.mrb[0].mxu0
      %1429 = vmatprep.mubr.f32.mxu0 0.0
      %1430 = vmatmul.mubr.f32.gmra.mrb[0].mxu0 %v1270
      %v1431 = vpop.f32.mrb[0].mxu0
      %v1432 = vadd.f32 %v1313, %v1431
      %v1433 = vpop.f32.mrb[0].mxu0
      %1434 = vmatprep.mubr.f32.mxu0 0.0
      %1435 = vmatmul.mubr.f32.gmra.mrb[0].mxu0 %v1271
      %v1436 = vpop.f32.mrb[0].mxu0
      %v1437 = vadd.f32 %v1313, %v1436
      %v1438 = vpop.f32.mrb[0].mxu0
      %1439 = vmatprep.mubr.f32.mxu0 0.0
      %1440 = vmatmul.mubr.f32.gmra.mrb[0].mxu0 %v1272
      %v1441 = vpop.f32.mrb[0].mxu0
      %v1442 = vadd.f32 %v1313, %v1441
      %v1443 = vpop.f32.mrb[0].mxu0
      %1444 = vmatprep.mubr.f32.mxu0 0.0
      %1445 = vmatmul.mubr.f32.gmra.mrb[0].mxu0 %v1273
      %v1446 = vpop.f32.mrb[0].mxu0
      %v1447 = vadd.f32 %v1313, %v1446
      %v1448 = vpop.f32.mrb[0].mxu0
      %1449 = vmatprep.mubr.f32.mxu0 0.0
      %1450 = vmatmul.mubr.f32.gmra.mrb[0].mxu0 %v1274
      %v1451 = vpop.f32.mrb[0].mxu0
      %v1452 = vadd.f32 %v1313, %v1451
      %v1453 = vpop.f32.mrb[0].mxu0
      %1454 = vmatprep.mubr.f32.mxu0 0.0
      %1455 = vmatmul.mubr.f32.gmra.mrb[0].mxu0 %v1275
      %v1456 = vpop.f32.mrb[0].mxu0
      %v1457 = vadd.f32 %v1313, %v1456
      %v1458 = vpop.f32.mrb[0].mxu0
      %1459 = vmatprep.mubr.f32.mxu0 0.0
      %1460 = vmatmul.mubr.f32.gmra.mrb[0].mxu0 %v1276
      %v1461 = vpop.f32.mrb[0].mxu0
      %v1462 = vadd.f32 %v1313, %v1461
      %v1463 = vpop.f32.mrb[0].mxu0
      %1464 = vmatprep.mubr.f32.mxu0 0.0
      %1465 = vmatmul.mubr.f32.gmra.mrb[0].mxu0 %v1277
      %v1466 = vpop.f32.mrb[0].mxu0
      %v1467 = vadd.f32 %v1313, %v1466
      %v1468 = vpop.f32.mrb[0].mxu0
      %1469 = vmatprep.mubr.f32.mxu0 0.0
      %1470 = vmatmul.mubr.f32.gmra.mrb[0].mxu0 %v1278
      %v1471 = vpop.f32.mrb[0].mxu0
      %v1472 = vadd.f32 %v1313, %v1471
      %v1473 = vpop.f32.mrb[0].mxu0
      %1474 = vmatprep.mubr.f32.mxu0 0.0
      %1475 = vmatmul.mubr.f32.gmra.mrb[0].mxu0 %v1279
      %v1476 = vpop.f32.mrb[0].mxu0
      %v1477 = vadd.f32 %v1313, %v1476
      %v1478 = vpop.f32.mrb[0].mxu0
      %1479 = vmatprep.mubr.f32.mxu0 0.0
      %1480 = vmatmul.mubr.f32.gmra.mrb[0].mxu0 %v1280
      %v1481 = vpop.f32.mrb[0].mxu0
      %v1482 = vadd.f32 %v1313, %v1481
      %v1483 = vpop.f32.mrb[0].mxu0
      %1484 = vmatprep.mubr.f32.mxu0 0.0
      %1485 = vmatmul.mubr.f32.gmra.mrb[0].mxu0 %v1281
      %v1486 = vpop.f32.mrb[0].mxu0
      %v1487 = vadd.f32 %v1313, %v1486
      %v1488 = vpop.f32.mrb[0].mxu0
      %1489 = vmatprep.mubr.f32.mxu0 0.0
      %1490 = vmatmul.mubr.f32.gmra.mrb[0].mxu0 %v1282
      %v1491 = vpop.f32.mrb[0].mxu0
      %v1492 = vadd.f32 %v1313, %v1491
      %v1493 = vpop.f32.mrb[0].mxu0
      %1494 = vmatprep.mubr.f32.mxu0 0.0
      %1495 = vmatmul.mubr.f32.gmra.mrb[0].mxu0 %v1283
      %v1496 = vpop.f32.mrb[0].mxu0
      %v1497 = vadd.f32 %v1313, %v1496
      %v1498 = vpop.f32.mrb[0].mxu0
      %1499 = vmatprep.mubr.f32.mxu0 0.0
      %1500 = vmatmul.mubr.f32.gmra.mrb[0].mxu0 %v1284
      %v1501 = vpop.f32.mrb[0].mxu0
      %v1502 = vadd.f32 %v1313, %v1501
      %v1503 = vpop.f32.mrb[0].mxu0
      %1504 = vmatprep.mubr.f32.mxu0 0.0
      %1505 = vmatmul.mubr.f32.gmra.mrb[0].mxu0 %v1285
      %v1506 = vpop.f32.mrb[0].mxu0
      %v1507 = vadd.f32 %v1313, %v1506
      %v1508 = vpop.f32.mrb[0].mxu0
      %1509 = vmatprep.mubr.f32.mxu0 0.0
      %1510 = vmatmul.mubr.f32.gmra.mrb[0].mxu0 %v1286
      %v1511 = vpop.f32.mrb[0].mxu0
      %v1512 = vadd.f32 %v1313, %v1511
      %v1513 = vpop.f32.mrb[0].mxu0
      %1514 = vmatprep.mubr.f32.mxu0 0.0
      %1515 = vmatmul.mubr.f32.gmra.mrb[0].mxu0 %v1287
      %v1516 = vpop.f32.mrb[0].mxu0
      %v1517 = vadd.f32 %v1313, %v1516
      %v1518 = vpop.f32.mrb[0].mxu0
      %1519 = vmatprep.mubr.f32.mxu0 0.0
      %1520 = vmatmul.mubr.f32.gmra.mrb[0].mxu0 %v1288
      %v1521 = vpop.f32.mrb[0].mxu0
      %v1522 = vadd.f32 %v1313, %v1521
      %v1523 = vpop.f32.mrb[0].mxu0
      %1524 = vmatprep.mubr.f32.mxu0 0.0
      %1525 = vmatmul.mubr.f32.gmra.mrb[0].mxu0 %v1289
      %v1526 = vpop.f32.mrb[0].mxu0
      %v1527 = vadd.f32 %v1313, %v1526
      %v1528 = vpop.f32.mrb[0].mxu0
      %1529 = vmatprep.mubr.f32.mxu0 0.0
      %1530 = vmatmul.mubr.f32.gmra.mrb[0].mxu0 %v1290
      %v1531 = vpop.f32.mrb[0].mxu0
      %v1532 = vadd.f32 %v1313, %v1531
      %v1533 = vpop.f32.mrb[0].mxu0
      %1534 = vmatprep.mubr.f32.mxu0 0.0
      %1535 = vmatmul.mubr.f32.gmra.mrb[0].mxu0 %v1291
      %v1536 = vpop.f32.mrb[0].mxu0
      %v1537 = vadd.f32 %v1313, %v1536
      %v1538 = vpop.f32.mrb[0].mxu0
      %1539 = vdwg.mxu0
      %v1540 = vmax.f32 %v1382, 0.0
      %v1541 = vmax.f32 %v1387, 0.0
      %v1542 = vmax.f32 %v1392, 0.0
      %v1543 = vmax.f32 %v1397, 0.0
      %v1544 = vmax.f32 %v1402, 0.0
      %v1545 = vmax.f32 %v1407, 0.0
      %v1546 = vmax.f32 %v1412, 0.0
      %v1547 = vmax.f32 %v1417, 0.0
      %v1548 = vmax.f32 %v1422, 0.0
      %v1549 = vmax.f32 %v1427, 0.0
      %v1550 = vmax.f32 %v1432, 0.0
      %v1551 = vmax.f32 %v1437, 0.0
      %v1552 = vmax.f32 %v1442, 0.0
      %v1553 = vmax.f32 %v1447, 0.0
      %v1554 = vmax.f32 %v1452, 0.0
      %v1555 = vmax.f32 %v1457, 0.0
      %v1556 = vmax.f32 %v1462, 0.0
      %v1557 = vmax.f32 %v1467, 0.0
      %v1558 = vmax.f32 %v1472, 0.0
      %v1559 = vmax.f32 %v1477, 0.0
      %v1560 = vmax.f32 %v1482, 0.0
      %v1561 = vmax.f32 %v1487, 0.0
      %v1562 = vmax.f32 %v1492, 0.0
      %v1563 = vmax.f32 %v1497, 0.0
      %v1564 = vmax.f32 %v1502, 0.0
      %v1565 = vmax.f32 %v1507, 0.0
      %v1566 = vmax.f32 %v1512, 0.0
      %v1567 = vmax.f32 %v1517, 0.0
      %v1568 = vmax.f32 %v1522, 0.0
      %v1569 = vmax.f32 %v1527, 0.0
      %v1570 = vmax.f32 %v1532, 0.0
      %v1571 = vmax.f32 %v1537, 0.0
      %v1572 = vlaneseq
      %v1573 = vshrl.u32 %v1572, 7
      %v1574 = vadd.s32 %v1573, 8
      %v1575 = vadd.s32 %v1573, 16
      %v1576 = vadd.s32 %v1573, 24
      %v1577 = vadd.s32 %v1573, 32
      %v1578 = vadd.s32 %v1573, 40
      %v1579 = vadd.s32 %v1573, 48
      %v1580 = vadd.s32 %v1573, 56
      %v1581 = vadd.s32 %v1573, 64
      %v1582 = vadd.s32 %v1573, 72
      %v1583 = vadd.s32 %v1573, 80
      %v1584 = vadd.s32 %v1573, 88
      %v1585 = vadd.s32 %v1573, 96
      %v1586 = vadd.s32 %v1573, 104
      %v1587 = vadd.s32 %v1573, 112
      %v1588 = vadd.s32 %v1573, 120
      %v1589 = vadd.s32 %v1573, 128
      %v1590 = vadd.s32 %v1573, 136
      %v1591 = vadd.s32 %v1573, 144
      %v1592 = vadd.s32 %v1573, 152
      %v1593 = vadd.s32 %v1573, 160
      %v1594 = vadd.s32 %v1573, 168
      %v1595 = vadd.s32 %v1573, 176
      %v1596 = vadd.s32 %v1573, 184
      %v1597 = vadd.s32 %v1573, 192
      %v1598 = vadd.s32 %v1573, 200
      %v1599 = vadd.s32 %v1573, 208
      %v1600 = vadd.s32 %v1573, 216
      %v1601 = vadd.s32 %v1573, 224
      %v1602 = vadd.s32 %v1573, 232
      %v1603 = vadd.s32 %v1573, 240
      %v1604 = vadd.s32 %v1573, 248
      %s1605 = smul.u32 %s31, 256
      %v1606 = vstv %s1605
      %v1607 = vadd.s32 %v1573, %v1606
      %v1608 = vadd.s32 %v1574, %v1606
      %v1609 = vadd.s32 %v1575, %v1606
      %v1610 = vadd.s32 %v1576, %v1606
      %v1611 = vadd.s32 %v1577, %v1606
      %v1612 = vadd.s32 %v1578, %v1606
      %v1613 = vadd.s32 %v1579, %v1606
      %v1614 = vadd.s32 %v1580, %v1606
      %v1615 = vadd.s32 %v1581, %v1606
      %v1616 = vadd.s32 %v1582, %v1606
      %v1617 = vadd.s32 %v1583, %v1606
      %v1618 = vadd.s32 %v1584, %v1606
      %v1619 = vadd.s32 %v1585, %v1606
      %v1620 = vadd.s32 %v1586, %v1606
      %v1621 = vadd.s32 %v1587, %v1606
      %v1622 = vadd.s32 %v1588, %v1606
      %v1623 = vadd.s32 %v1589, %v1606
      %v1624 = vadd.s32 %v1590, %v1606
      %v1625 = vadd.s32 %v1591, %v1606
      %v1626 = vadd.s32 %v1592, %v1606
      %v1627 = vadd.s32 %v1593, %v1606
      %v1628 = vadd.s32 %v1594, %v1606
      %v1629 = vadd.s32 %v1595, %v1606
      %v1630 = vadd.s32 %v1596, %v1606
      %v1631 = vadd.s32 %v1597, %v1606
      %v1632 = vadd.s32 %v1598, %v1606
      %v1633 = vadd.s32 %v1599, %v1606
      %v1634 = vadd.s32 %v1600, %v1606
      %v1635 = vadd.s32 %v1601, %v1606
      %v1636 = vadd.s32 %v1602, %v1606
      %v1637 = vadd.s32 %v1603, %v1606
      %v1638 = vadd.s32 %v1604, %v1606
      %v1639 = vstv %s562
      %vm1640 = vcmp.lt.s32.totalorder %v1607, %v1639
      %vm1641 = vcmp.lt.s32.totalorder %v1608, %v1639
      %vm1642 = vcmp.lt.s32.totalorder %v1609, %v1639
      %vm1643 = vcmp.lt.s32.totalorder %v1610, %v1639
      %vm1644 = vcmp.lt.s32.totalorder %v1611, %v1639
      %vm1645 = vcmp.lt.s32.totalorder %v1612, %v1639
      %vm1646 = vcmp.lt.s32.totalorder %v1613, %v1639
      %vm1647 = vcmp.lt.s32.totalorder %v1614, %v1639
      %vm1648 = vcmp.lt.s32.totalorder %v1615, %v1639
      %vm1649 = vcmp.lt.s32.totalorder %v1616, %v1639
      %vm1650 = vcmp.lt.s32.totalorder %v1617, %v1639
      %vm1651 = vcmp.lt.s32.totalorder %v1618, %v1639
      %vm1652 = vcmp.lt.s32.totalorder %v1619, %v1639
      %vm1653 = vcmp.lt.s32.totalorder %v1620, %v1639
      %vm1654 = vcmp.lt.s32.totalorder %v1621, %v1639
      %vm1655 = vcmp.lt.s32.totalorder %v1622, %v1639
      %vm1656 = vcmp.lt.s32.totalorder %v1623, %v1639
      %vm1657 = vcmp.lt.s32.totalorder %v1624, %v1639
      %vm1658 = vcmp.lt.s32.totalorder %v1625, %v1639
      %vm1659 = vcmp.lt.s32.totalorder %v1626, %v1639
      %vm1660 = vcmp.lt.s32.totalorder %v1627, %v1639
      %vm1661 = vcmp.lt.s32.totalorder %v1628, %v1639
      %vm1662 = vcmp.lt.s32.totalorder %v1629, %v1639
      %vm1663 = vcmp.lt.s32.totalorder %v1630, %v1639
      %vm1664 = vcmp.lt.s32.totalorder %v1631, %v1639
      %vm1665 = vcmp.lt.s32.totalorder %v1632, %v1639
      %vm1666 = vcmp.lt.s32.totalorder %v1633, %v1639
      %vm1667 = vcmp.lt.s32.totalorder %v1634, %v1639
      %vm1668 = vcmp.lt.s32.totalorder %v1635, %v1639
      %vm1669 = vcmp.lt.s32.totalorder %v1636, %v1639
      %vm1670 = vcmp.lt.s32.totalorder %v1637, %v1639
      %vm1671 = vcmp.lt.s32.totalorder %v1638, %v1639
      %v1672 = vsel %vm1640, 1, 0
      %v1673 = vsel %vm1641, 1, 0
      %v1674 = vsel %vm1642, 1, 0
      %v1675 = vsel %vm1643, 1, 0
      %v1676 = vsel %vm1644, 1, 0
      %v1677 = vsel %vm1645, 1, 0
      %v1678 = vsel %vm1646, 1, 0
      %v1679 = vsel %vm1647, 1, 0
      %v1680 = vsel %vm1648, 1, 0
      %v1681 = vsel %vm1649, 1, 0
      %v1682 = vsel %vm1650, 1, 0
      %v1683 = vsel %vm1651, 1, 0
      %v1684 = vsel %vm1652, 1, 0
      %v1685 = vsel %vm1653, 1, 0
      %v1686 = vsel %vm1654, 1, 0
      %v1687 = vsel %vm1655, 1, 0
      %v1688 = vsel %vm1656, 1, 0
      %v1689 = vsel %vm1657, 1, 0
      %v1690 = vsel %vm1658, 1, 0
      %v1691 = vsel %vm1659, 1, 0
      %v1692 = vsel %vm1660, 1, 0
      %v1693 = vsel %vm1661, 1, 0
      %v1694 = vsel %vm1662, 1, 0
      %v1695 = vsel %vm1663, 1, 0
      %v1696 = vsel %vm1664, 1, 0
      %v1697 = vsel %vm1665, 1, 0
      %v1698 = vsel %vm1666, 1, 0
      %v1699 = vsel %vm1667, 1, 0
      %v1700 = vsel %vm1668, 1, 0
      %v1701 = vsel %vm1669, 1, 0
      %v1702 = vsel %vm1670, 1, 0
      %v1703 = vsel %vm1671, 1, 0
      %vm1704 = vcmp.eq.s32.totalorder %v1672, 1
      %vm1705 = vcmp.eq.s32.totalorder %v1673, 1
      %vm1706 = vcmp.eq.s32.totalorder %v1674, 1
      %vm1707 = vcmp.eq.s32.totalorder %v1675, 1
      %vm1708 = vcmp.eq.s32.totalorder %v1676, 1
      %vm1709 = vcmp.eq.s32.totalorder %v1677, 1
      %vm1710 = vcmp.eq.s32.totalorder %v1678, 1
      %vm1711 = vcmp.eq.s32.totalorder %v1679, 1
      %vm1712 = vcmp.eq.s32.totalorder %v1680, 1
      %vm1713 = vcmp.eq.s32.totalorder %v1681, 1
      %vm1714 = vcmp.eq.s32.totalorder %v1682, 1
      %vm1715 = vcmp.eq.s32.totalorder %v1683, 1
      %vm1716 = vcmp.eq.s32.totalorder %v1684, 1
      %vm1717 = vcmp.eq.s32.totalorder %v1685, 1
      %vm1718 = vcmp.eq.s32.totalorder %v1686, 1
      %vm1719 = vcmp.eq.s32.totalorder %v1687, 1
      %vm1720 = vcmp.eq.s32.totalorder %v1688, 1
      %vm1721 = vcmp.eq.s32.totalorder %v1689, 1
      %vm1722 = vcmp.eq.s32.totalorder %v1690, 1
      %vm1723 = vcmp.eq.s32.totalorder %v1691, 1
      %vm1724 = vcmp.eq.s32.totalorder %v1692, 1
      %vm1725 = vcmp.eq.s32.totalorder %v1693, 1
      %vm1726 = vcmp.eq.s32.totalorder %v1694, 1
      %vm1727 = vcmp.eq.s32.totalorder %v1695, 1
      %vm1728 = vcmp.eq.s32.totalorder %v1696, 1
      %vm1729 = vcmp.eq.s32.totalorder %v1697, 1
      %vm1730 = vcmp.eq.s32.totalorder %v1698, 1
      %vm1731 = vcmp.eq.s32.totalorder %v1699, 1
      %vm1732 = vcmp.eq.s32.totalorder %v1700, 1
      %vm1733 = vcmp.eq.s32.totalorder %v1701, 1
      %vm1734 = vcmp.eq.s32.totalorder %v1702, 1
      %vm1735 = vcmp.eq.s32.totalorder %v1703, 1
      %v1736 = vsel %vm1704, %v1540, 0.0
      %v1737 = vsel %vm1705, %v1541, 0.0
      %v1738 = vsel %vm1706, %v1542, 0.0
      %v1739 = vsel %vm1707, %v1543, 0.0
      %v1740 = vsel %vm1708, %v1544, 0.0
      %v1741 = vsel %vm1709, %v1545, 0.0
      %v1742 = vsel %vm1710, %v1546, 0.0
      %v1743 = vsel %vm1711, %v1547, 0.0
      %v1744 = vsel %vm1712, %v1548, 0.0
      %v1745 = vsel %vm1713, %v1549, 0.0
      %v1746 = vsel %vm1714, %v1550, 0.0
      %v1747 = vsel %vm1715, %v1551, 0.0
      %v1748 = vsel %vm1716, %v1552, 0.0
      %v1749 = vsel %vm1717, %v1553, 0.0
      %v1750 = vsel %vm1718, %v1554, 0.0
      %v1751 = vsel %vm1719, %v1555, 0.0
      %v1752 = vsel %vm1720, %v1556, 0.0
      %v1753 = vsel %vm1721, %v1557, 0.0
      %v1754 = vsel %vm1722, %v1558, 0.0
      %v1755 = vsel %vm1723, %v1559, 0.0
      %v1756 = vsel %vm1724, %v1560, 0.0
      %v1757 = vsel %vm1725, %v1561, 0.0
      %v1758 = vsel %vm1726, %v1562, 0.0
      %v1759 = vsel %vm1727, %v1563, 0.0
      %v1760 = vsel %vm1728, %v1564, 0.0
      %v1761 = vsel %vm1729, %v1565, 0.0
      %v1762 = vsel %vm1730, %v1566, 0.0
      %v1763 = vsel %vm1731, %v1567, 0.0
      %v1764 = vsel %vm1732, %v1568, 0.0
      %v1765 = vsel %vm1733, %v1569, 0.0
      %v1766 = vsel %vm1734, %v1570, 0.0
      %v1767 = vsel %vm1735, %v1571, 0.0
      %s1768 = scalar_lea.vmem [#allocation3], %s1605
      %1769 = vst [vmem:[%s1768] sm:$0xff] %v1736
      %1770 = vst [vmem:[%s1768 + $0x8] sm:$0xff] %v1737
      %1771 = vst [vmem:[%s1768 + $0x10] sm:$0xff] %v1738
      %1772 = vst [vmem:[%s1768 + $0x18] sm:$0xff] %v1739
      %1773 = vst [vmem:[%s1768 + $0x20] sm:$0xff] %v1740
      %1774 = vst [vmem:[%s1768 + $0x28] sm:$0xff] %v1741
      %1775 = vst [vmem:[%s1768 + $0x30] sm:$0xff] %v1742
      %1776 = vst [vmem:[%s1768 + $0x38] sm:$0xff] %v1743
      %1777 = vst [vmem:[%s1768 + $0x40] sm:$0xff] %v1744
      %1778 = vst [vmem:[%s1768 + $0x48] sm:$0xff] %v1745
      %1779 = vst [vmem:[%s1768 + $0x50] sm:$0xff] %v1746
      %1780 = vst [vmem:[%s1768 + $0x58] sm:$0xff] %v1747
      %1781 = vst [vmem:[%s1768 + $0x60] sm:$0xff] %v1748
      %1782 = vst [vmem:[%s1768 + $0x68] sm:$0xff] %v1749
      %1783 = vst [vmem:[%s1768 + $0x70] sm:$0xff] %v1750
      %1784 = vst [vmem:[%s1768 + $0x78] sm:$0xff] %v1751
      %1785 = vst [vmem:[%s1768 + $0x80] sm:$0xff] %v1752
      %1786 = vst [vmem:[%s1768 + $0x88] sm:$0xff] %v1753
      %1787 = vst [vmem:[%s1768 + $0x90] sm:$0xff] %v1754
      %1788 = vst [vmem:[%s1768 + $0x98] sm:$0xff] %v1755
      %1789 = vst [vmem:[%s1768 + $0xa0] sm:$0xff] %v1756
      %1790 = vst [vmem:[%s1768 + $0xa8] sm:$0xff] %v1757
      %1791 = vst [vmem:[%s1768 + $0xb0] sm:$0xff] %v1758
      %1792 = vst [vmem:[%s1768 + $0xb8] sm:$0xff] %v1759
      %1793 = vst [vmem:[%s1768 + $0xc0] sm:$0xff] %v1760
      %1794 = vst [vmem:[%s1768 + $0xc8] sm:$0xff] %v1761
      %1795 = vst [vmem:[%s1768 + $0xd0] sm:$0xff] %v1762
      %1796 = vst [vmem:[%s1768 + $0xd8] sm:$0xff] %v1763
      %1797 = vst [vmem:[%s1768 + $0xe0] sm:$0xff] %v1764
      %1798 = vst [vmem:[%s1768 + $0xe8] sm:$0xff] %v1765
      %1799 = vst [vmem:[%s1768 + $0xf0] sm:$0xff] %v1766
      %1800 = vst [vmem:[%s1768 + $0xf8] sm:$0xff] %v1767
      %v1801 = vld [vmem:[#allocation4] sm:$0x1]
      %v1802 = vadd.f32 %v1736, %v1737
      %v1803 = vadd.f32 %v1802, %v1738
      %v1804 = vadd.f32 %v1803, %v1739
      %v1805 = vadd.f32 %v1804, %v1740
      %v1806 = vadd.f32 %v1805, %v1741
      %v1807 = vadd.f32 %v1806, %v1742
      %v1808 = vadd.f32 %v1807, %v1743
      %v1809 = vadd.f32 %v1808, %v1744
      %v1810 = vadd.f32 %v1809, %v1745
      %v1811 = vadd.f32 %v1810, %v1746
      %v1812 = vadd.f32 %v1811, %v1747
      %v1813 = vadd.f32 %v1812, %v1748
      %v1814 = vadd.f32 %v1813, %v1749
      %v1815 = vadd.f32 %v1814, %v1750
      %v1816 = vadd.f32 %v1815, %v1751
      %v1817 = vadd.f32 %v1816, %v1752
      %v1818 = vadd.f32 %v1817, %v1753
      %v1819 = vadd.f32 %v1818, %v1754
      %v1820 = vadd.f32 %v1819, %v1755
      %v1821 = vadd.f32 %v1820, %v1756
      %v1822 = vadd.f32 %v1821, %v1757
      %v1823 = vadd.f32 %v1822, %v1758
      %v1824 = vadd.f32 %v1823, %v1759
      %v1825 = vadd.f32 %v1824, %v1760
      %v1826 = vadd.f32 %v1825, %v1761
      %v1827 = vadd.f32 %v1826, %v1762
      %v1828 = vadd.f32 %v1827, %v1763
      %v1829 = vadd.f32 %v1828, %v1764
      %v1830 = vadd.f32 %v1829, %v1765
      %v1831 = vadd.f32 %v1830, %v1766
      %v1832 = vadd.f32 %v1831, %v1767
      %v1833 = vrot.slane %v1832, 4
      %v1834 = vadd.f32 %v1832, %v1833
      %v1835 = vrot.slane %v1834, 2
      %v1836 = vadd.f32 %v1834, %v1835
      %v1837 = vrot.slane %v1836, 1
      %v1838 = vadd.f32 %v1836, %v1837
      %v1839 = vadd.f32 %v1801, %v1838
      %1840 = vst [vmem:[#allocation4] sm:$0x1] %v1839
      %v1841 = vld [vmem:[#allocation5] sm:$0x1]
      %v1842 = vmul.f32 %v1736, %v1736
      %v1843 = vmul.f32 %v1737, %v1737
      %v1844 = vmul.f32 %v1738, %v1738
      %v1845 = vmul.f32 %v1739, %v1739
      %v1846 = vmul.f32 %v1740, %v1740
      %v1847 = vmul.f32 %v1741, %v1741
      %v1848 = vmul.f32 %v1742, %v1742
      %v1849 = vmul.f32 %v1743, %v1743
      %v1850 = vmul.f32 %v1744, %v1744
      %v1851 = vmul.f32 %v1745, %v1745
      %v1852 = vmul.f32 %v1746, %v1746
      %v1853 = vmul.f32 %v1747, %v1747
      %v1854 = vmul.f32 %v1748, %v1748
      %v1855 = vmul.f32 %v1749, %v1749
      %v1856 = vmul.f32 %v1750, %v1750
      %v1857 = vmul.f32 %v1751, %v1751
      %v1858 = vmul.f32 %v1752, %v1752
      %v1859 = vmul.f32 %v1753, %v1753
      %v1860 = vmul.f32 %v1754, %v1754
      %v1861 = vmul.f32 %v1755, %v1755
      %v1862 = vmul.f32 %v1756, %v1756
      %v1863 = vmul.f32 %v1757, %v1757
      %v1864 = vmul.f32 %v1758, %v1758
      %v1865 = vmul.f32 %v1759, %v1759
      %v1866 = vmul.f32 %v1760, %v1760
      %v1867 = vmul.f32 %v1761, %v1761
      %v1868 = vmul.f32 %v1762, %v1762
      %v1869 = vmul.f32 %v1763, %v1763
      %v1870 = vmul.f32 %v1764, %v1764
      %v1871 = vmul.f32 %v1765, %v1765
      %v1872 = vmul.f32 %v1766, %v1766
      %v1873 = vmul.f32 %v1767, %v1767
      %v1874 = vadd.f32 %v1842, %v1843
      %v1875 = vadd.f32 %v1874, %v1844
      %v1876 = vadd.f32 %v1875, %v1845
      %v1877 = vadd.f32 %v1876, %v1846
      %v1878 = vadd.f32 %v1877, %v1847
      %v1879 = vadd.f32 %v1878, %v1848
      %v1880 = vadd.f32 %v1879, %v1849
      %v1881 = vadd.f32 %v1880, %v1850
      %v1882 = vadd.f32 %v1881, %v1851
      %v1883 = vadd.f32 %v1882, %v1852
      %v1884 = vadd.f32 %v1883, %v1853
      %v1885 = vadd.f32 %v1884, %v1854
      %v1886 = vadd.f32 %v1885, %v1855
      %v1887 = vadd.f32 %v1886, %v1856
      %v1888 = vadd.f32 %v1887, %v1857
      %v1889 = vadd.f32 %v1888, %v1858
      %v1890 = vadd.f32 %v1889, %v1859
      %v1891 = vadd.f32 %v1890, %v1860
      %v1892 = vadd.f32 %v1891, %v1861
      %v1893 = vadd.f32 %v1892, %v1862
      %v1894 = vadd.f32 %v1893, %v1863
      %v1895 = vadd.f32 %v1894, %v1864
      %v1896 = vadd.f32 %v1895, %v1865
      %v1897 = vadd.f32 %v1896, %v1866
      %v1898 = vadd.f32 %v1897, %v1867
      %v1899 = vadd.f32 %v1898, %v1868
      %v1900 = vadd.f32 %v1899, %v1869
      %v1901 = vadd.f32 %v1900, %v1870
      %v1902 = vadd.f32 %v1901, %v1871
      %v1903 = vadd.f32 %v1902, %v1872
      %v1904 = vadd.f32 %v1903, %v1873
      %v1905 = vrot.slane %v1904, 4
      %v1906 = vadd.f32 %v1904, %v1905
      %v1907 = vrot.slane %v1906, 2
      %v1908 = vadd.f32 %v1906, %v1907
      %v1909 = vrot.slane %v1908, 1
      %v1910 = vadd.f32 %v1908, %v1909
      %v1911 = vadd.f32 %v1841, %v1910
      %1912 = vst [vmem:[#allocation5] sm:$0x1] %v1911
      // Predicated region
      $region81: #{net_forward.1} parent=71 // pred_check
        %p1913 = pneg %p568
      $region82: #{net_forward.1} parent=71 // pred_check_branch
        %1915 = sbr.rel (%p1913) target = $region84
      $region83: #{net_forward.1} parent=71 // pred_region
        %v1916 = vld [vmem:[#allocation4] sm:$0x1]
        %v1917 = vstv %s566
        %v1918 = vmul.f32 %v1916, %v1917
        %v1919 = vld [vmem:[#allocation5] sm:$0x1]
        %v1920 = vmul.f32 %v1919, %v1917
        %v1921 = vmul.f32 %v1918, %v1918
        %v1922 = vsub.f32 %v1920, %v1921
        %v1923 = vmax.f32 %v1922, 0.0
        %v1924 = vld [vmem:[%s552] sm:$0x1]
        %v1925 = vadd.f32 %v1923, 1e-05
        %v1926 = vrsqrt.pop %v1925
        %v1927 = vmul.f32 %v1924, %v1926
        %v1928 = vld [vmem:[%s555] sm:$0x1]
        %v1929 = vmul.f32 %v1918, %v1927
        %v1930 = vsub.f32 %v1928, %v1929
        %v1931 = vld [vmem:[#allocation3] sm:$0xff]
        %v1932 = vld [vmem:[#allocation3 + $0x8] sm:$0xff]
        %v1933 = vld [vmem:[#allocation3 + $0x10] sm:$0xff]
        %v1934 = vld [vmem:[#allocation3 + $0x18] sm:$0xff]
        %v1935 = vld [vmem:[#allocation3 + $0x20] sm:$0xff]
        %v1936 = vld [vmem:[#allocation3 + $0x28] sm:$0xff]
        %v1937 = vld [vmem:[#allocation3 + $0x30] sm:$0xff]
        %v1938 = vld [vmem:[#allocation3 + $0x38] sm:$0xff]
        %v1939 = vld [vmem:[#allocation3 + $0x40] sm:$0xff]
        %v1940 = vld [vmem:[#allocation3 + $0x48] sm:$0xff]
        %v1941 = vld [vmem:[#allocation3 + $0x50] sm:$0xff]
        %v1942 = vld [vmem:[#allocation3 + $0x58] sm:$0xff]
        %v1943 = vld [vmem:[#allocation3 + $0x60] sm:$0xff]
        %v1944 = vld [vmem:[#allocation3 + $0x68] sm:$0xff]
        %v1945 = vld [vmem:[#allocation3 + $0x70] sm:$0xff]
        %v1946 = vld [vmem:[#allocation3 + $0x78] sm:$0xff]
        %v1947 = vld [vmem:[#allocation3 + $0x80] sm:$0xff]
        %v1948 = vld [vmem:[#allocation3 + $0x88] sm:$0xff]
        %v1949 = vld [vmem:[#allocation3 + $0x90] sm:$0xff]
        %v1950 = vld [vmem:[#allocation3 + $0x98] sm:$0xff]
        %v1951 = vld [vmem:[#allocation3 + $0xa0] sm:$0xff]
        %v1952 = vld [vmem:[#allocation3 + $0xa8] sm:$0xff]
        %v1953 = vld [vmem:[#allocation3 + $0xb0] sm:$0xff]
        %v1954 = vld [vmem:[#allocation3 + $0xb8] sm:$0xff]
        %v1955 = vld [vmem:[#allocation3 + $0xc0] sm:$0xff]
        %v1956 = vld [vmem:[#allocation3 + $0xc8] sm:$0xff]
        %v1957 = vld [vmem:[#allocation3 + $0xd0] sm:$0xff]
        %v1958 = vld [vmem:[#allocation3 + $0xd8] sm:$0xff]
        %v1959 = vld [vmem:[#allocation3 + $0xe0] sm:$0xff]
        %v1960 = vld [vmem:[#allocation3 + $0xe8] sm:$0xff]
        %v1961 = vld [vmem:[#allocation3 + $0xf0] sm:$0xff]
        %v1962 = vld [vmem:[#allocation3 + $0xf8] sm:$0xff]
        %v1964 = vlaneseq
        %v1965 = vshrl.u32 %v1964, 7
        %v1966 = vsub.s32 0, %v1965
        %v1967 = vrot.slane %v1927, %v1966
        %v1969 = vmul.f32 %v1931, %v1967
        %v1970 = vmul.f32 %v1932, %v1967
        %v1971 = vmul.f32 %v1933, %v1967
        %v1972 = vmul.f32 %v1934, %v1967
        %v1973 = vmul.f32 %v1935, %v1967
        %v1974 = vmul.f32 %v1936, %v1967
        %v1975 = vmul.f32 %v1937, %v1967
        %v1976 = vmul.f32 %v1938, %v1967
        %v1977 = vmul.f32 %v1939, %v1967
        %v1978 = vmul.f32 %v1940, %v1967
        %v1979 = vmul.f32 %v1941, %v1967
        %v1980 = vmul.f32 %v1942, %v1967
        %v1981 = vmul.f32 %v1943, %v1967
        %v1982 = vmul.f32 %v1944, %v1967
        %v1983 = vmul.f32 %v1945, %v1967
        %v1984 = vmul.f32 %v1946, %v1967
        %v1985 = vmul.f32 %v1947, %v1967
        %v1986 = vmul.f32 %v1948, %v1967
        %v1987 = vmul.f32 %v1949, %v1967
        %v1988 = vmul.f32 %v1950, %v1967
        %v1989 = vmul.f32 %v1951, %v1967
        %v1990 = vmul.f32 %v1952, %v1967
        %v1991 = vmul.f32 %v1953, %v1967
        %v1992 = vmul.f32 %v1954, %v1967
        %v1993 = vmul.f32 %v1955, %v1967
        %v1994 = vmul.f32 %v1956, %v1967
        %v1995 = vmul.f32 %v1957, %v1967
        %v1996 = vmul.f32 %v1958, %v1967
        %v1997 = vmul.f32 %v1959, %v1967
        %v1998 = vmul.f32 %v1960, %v1967
        %v1999 = vmul.f32 %v1961, %v1967
        %v2000 = vmul.f32 %v1962, %v1967
        %v2002 = vlaneseq
        %v2003 = vshrl.u32 %v2002, 7
        %v2004 = vsub.s32 0, %v2003
        %v2005 = vrot.slane %v1930, %v2004
        %v2007 = vadd.f32 %v1969, %v2005
        %v2008 = vadd.f32 %v1970, %v2005
        %v2009 = vadd.f32 %v1971, %v2005
        %v2010 = vadd.f32 %v1972, %v2005
        %v2011 = vadd.f32 %v1973, %v2005
        %v2012 = vadd.f32 %v1974, %v2005
        %v2013 = vadd.f32 %v1975, %v2005
        %v2014 = vadd.f32 %v1976, %v2005
        %v2015 = vadd.f32 %v1977, %v2005
        %v2016 = vadd.f32 %v1978, %v2005
        %v2017 = vadd.f32 %v1979, %v2005
        %v2018 = vadd.f32 %v1980, %v2005
        %v2019 = vadd.f32 %v1981, %v2005
        %v2020 = vadd.f32 %v1982, %v2005
        %v2021 = vadd.f32 %v1983, %v2005
        %v2022 = vadd.f32 %v1984, %v2005
        %v2023 = vadd.f32 %v1985, %v2005
        %v2024 = vadd.f32 %v1986, %v2005
        %v2025 = vadd.f32 %v1987, %v2005
        %v2026 = vadd.f32 %v1988, %v2005
        %v2027 = vadd.f32 %v1989, %v2005
        %v2028 = vadd.f32 %v1990, %v2005
        %v2029 = vadd.f32 %v1991, %v2005
        %v2030 = vadd.f32 %v1992, %v2005
        %v2031 = vadd.f32 %v1993, %v2005
        %v2032 = vadd.f32 %v1994, %v2005
        %v2033 = vadd.f32 %v1995, %v2005
        %v2034 = vadd.f32 %v1996, %v2005
        %v2035 = vadd.f32 %v1997, %v2005
        %v2036 = vadd.f32 %v1998, %v2005
        %v2037 = vadd.f32 %v1999, %v2005
        %v2038 = vadd.f32 %v2000, %v2005
        %v2039 = vpack.c.bf16 %v2008, %v2007
        %v2040 = vpack.c.bf16 %v2010, %v2009
        %v2041 = vpack.c.bf16 %v2012, %v2011
        %v2042 = vpack.c.bf16 %v2014, %v2013
        %v2043 = vpack.c.bf16 %v2016, %v2015
        %v2044 = vpack.c.bf16 %v2018, %v2017
        %v2045 = vpack.c.bf16 %v2020, %v2019
        %v2046 = vpack.c.bf16 %v2022, %v2021
        %v2047 = vpack.c.bf16 %v2024, %v2023
        %v2048 = vpack.c.bf16 %v2026, %v2025
        %v2049 = vpack.c.bf16 %v2028, %v2027
        %v2050 = vpack.c.bf16 %v2030, %v2029
        %v2051 = vpack.c.bf16 %v2032, %v2031
        %v2052 = vpack.c.bf16 %v2034, %v2033
        %v2053 = vpack.c.bf16 %v2036, %v2035
        %v2054 = vpack.c.bf16 %v2038, %v2037
        %2055 = vst [vmem:[#allocation2] sm:$0xff] %v2039
        %2056 = vst [vmem:[#allocation2 + $0x8] sm:$0xff] %v2040
        %2057 = vst [vmem:[#allocation2 + $0x10] sm:$0xff] %v2041
        %2058 = vst [vmem:[#allocation2 + $0x18] sm:$0xff] %v2042
        %2059 = vst [vmem:[#allocation2 + $0x20] sm:$0xff] %v2043
        %2060 = vst [vmem:[#allocation2 + $0x28] sm:$0xff] %v2044
        %2061 = vst [vmem:[#allocation2 + $0x30] sm:$0xff] %v2045
        %2062 = vst [vmem:[#allocation2 + $0x38] sm:$0xff] %v2046
        %2063 = vst [vmem:[#allocation2 + $0x40] sm:$0xff] %v2047
        %2064 = vst [vmem:[#allocation2 + $0x48] sm:$0xff] %v2048
        %2065 = vst [vmem:[#allocation2 + $0x50] sm:$0xff] %v2049
        %2066 = vst [vmem:[#allocation2 + $0x58] sm:$0xff] %v2050
        %2067 = vst [vmem:[#allocation2 + $0x60] sm:$0xff] %v2051
        %2068 = vst [vmem:[#allocation2 + $0x68] sm:$0xff] %v2052
        %2069 = vst [vmem:[#allocation2 + $0x70] sm:$0xff] %v2053
        %2070 = vst [vmem:[#allocation2 + $0x78] sm:$0xff] %v2054
        %v2071 = vld [vmem:[%s3] sm:$0xff]
        %v2072 = vld [vmem:[%s3 + $0x8] sm:$0xff]
        %2073 = vmatprep.subr.mxu0 0.0
        %2074 = vmatpush1.msra.mxu0 %v2007
        %2075 = vmatprep.subr.mxu0 0.0
        %2076 = vmatpush1.msra.mxu0 %v2008
        %2077 = vmatprep.subr.mxu0 0.0
        %2078 = vmatpush1.msra.mxu0 %v2009
        %2079 = vmatprep.subr.mxu0 0.0
        %2080 = vmatpush1.msra.mxu0 %v2010
        %2081 = vmatprep.subr.mxu0 0.0
        %2082 = vmatpush1.msra.mxu0 %v2011
        %2083 = vmatprep.subr.mxu0 0.0
        %2084 = vmatpush1.msra.mxu0 %v2012
        %2085 = vmatprep.subr.mxu0 0.0
        %2086 = vmatpush1.msra.mxu0 %v2013
        %2087 = vmatprep.subr.mxu0 0.0
        %2088 = vmatpush1.msra.mxu0 %v2014
        %2089 = vmatprep.subr.mxu0 0.0
        %2090 = vmatpush1.msra.mxu0 %v2015
        %2091 = vmatprep.subr.mxu0 0.0
        %2092 = vmatpush1.msra.mxu0 %v2016
        %2093 = vmatprep.subr.mxu0 0.0
        %2094 = vmatpush1.msra.mxu0 %v2017
        %2095 = vmatprep.subr.mxu0 0.0
        %2096 = vmatpush1.msra.mxu0 %v2018
        %2097 = vmatprep.subr.mxu0 0.0
        %2098 = vmatpush1.msra.mxu0 %v2019
        %2099 = vmatprep.subr.mxu0 0.0
        %2100 = vmatpush1.msra.mxu0 %v2020
        %2101 = vmatprep.subr.mxu0 0.0
        %2102 = vmatpush1.msra.mxu0 %v2021
        %2103 = vmatprep.subr.mxu0 0.0
        %2104 = vmatpush1.msra.mxu0 %v2022
        %2105 = vmatprep.subr.mxu0 0.0
        %2106 = vmatpush1.msra.mxu0 %v2023
        %2107 = vmatprep.subr.mxu0 0.0
        %2108 = vmatpush1.msra.mxu0 %v2024
        %2109 = vmatprep.subr.mxu0 0.0
        %2110 = vmatpush1.msra.mxu0 %v2025
        %2111 = vmatprep.subr.mxu0 0.0
        %2112 = vmatpush1.msra.mxu0 %v2026
        %2113 = vmatprep.subr.mxu0 0.0
        %2114 = vmatpush1.msra.mxu0 %v2027
        %2115 = vmatprep.subr.mxu0 0.0
        %2116 = vmatpush1.msra.mxu0 %v2028
        %2117 = vmatprep.subr.mxu0 0.0
        %2118 = vmatpush1.msra.mxu0 %v2029
        %2119 = vmatprep.subr.mxu0 0.0
        %2120 = vmatpush1.msra.mxu0 %v2030
        %2121 = vmatprep.subr.mxu0 0.0
        %2122 = vmatpush1.msra.mxu0 %v2031
        %2123 = vmatprep.subr.mxu0 0.0
        %2124 = vmatpush1.msra.mxu0 %v2032
        %2125 = vmatprep.subr.mxu0 0.0
        %2126 = vmatpush1.msra.mxu0 %v2033
        %2127 = vmatprep.subr.mxu0 0.0
        %2128 = vmatpush1.msra.mxu0 %v2034
        %2129 = vmatprep.subr.mxu0 0.0
        %2130 = vmatpush1.msra.mxu0 %v2035
        %2131 = vmatprep.subr.mxu0 0.0
        %2132 = vmatpush1.msra.mxu0 %v2036
        %2133 = vmatprep.subr.mxu0 0.0
        %2134 = vmatpush1.msra.mxu0 %v2037
        %2135 = vmatprep.subr.mxu0 0.0
        %2136 = vmatpush1.msra.mxu0 %v2038
        %2137 = vmatprep.mubr.f32.mxu0 %v2072
        %2138 = vmatmul.mubr.f32.gmra.mrb[0].mxu0 %v2071
        %v2139 = vpop.f32.mrb[0].mxu0
        %v2140 = vadd.f32 0.0, %v2139
        %v2141 = vpop.f32.mrb[0].mxu0
        %2142 = vdwg.mxu0
        %v2143 = vld [vmem:[#allocation6] sm:$0xff]
        %v2144 = vld [vmem:[%s560] sm:$0xff]
        %v2145 = vld [vmem:[%s560 + $0x8] sm:$0xff]
        %v2146 = vld [vmem:[%s560 + $0x10] sm:$0xff]
        %v2147 = vld [vmem:[%s560 + $0x18] sm:$0xff]
        %v2148 = vld [vmem:[%s560 + $0x20] sm:$0xff]
        %v2149 = vld [vmem:[%s560 + $0x28] sm:$0xff]
        %v2150 = vld [vmem:[%s560 + $0x30] sm:$0xff]
        %v2151 = vld [vmem:[%s560 + $0x38] sm:$0xff]
        %v2152 = vld [vmem:[%s560 + $0x40] sm:$0xff]
        %v2153 = vld [vmem:[%s560 + $0x48] sm:$0xff]
        %v2154 = vld [vmem:[%s560 + $0x50] sm:$0xff]
        %v2155 = vld [vmem:[%s560 + $0x58] sm:$0xff]
        %v2156 = vld [vmem:[%s560 + $0x60] sm:$0xff]
        %v2157 = vld [vmem:[%s560 + $0x68] sm:$0xff]
        %v2158 = vld [vmem:[%s560 + $0x70] sm:$0xff]
        %v2159 = vld [vmem:[%s560 + $0x78] sm:$0xff]
        %2160 = vmatprep.subr.mxu0 0.0
        %2161 = vmatpush1.msra.mxu0 %v2144
        %2162 = vmatprep.subr.mxu0 0.0
        %2163 = vmatpush1.msra.mxu0 %v2145
        %2164 = vmatprep.subr.mxu0 0.0
        %2165 = vmatpush1.msra.mxu0 %v2146
        %2166 = vmatprep.subr.mxu0 0.0
        %2167 = vmatpush1.msra.mxu0 %v2147
        %2168 = vmatprep.subr.mxu0 0.0
        %2169 = vmatpush1.msra.mxu0 %v2148
        %2170 = vmatprep.subr.mxu0 0.0
        %2171 = vmatpush1.msra.mxu0 %v2149
        %2172 = vmatprep.subr.mxu0 0.0
        %2173 = vmatpush1.msra.mxu0 %v2150
        %2174 = vmatprep.subr.mxu0 0.0
        %2175 = vmatpush1.msra.mxu0 %v2151
        %2176 = vmatprep.subr.mxu0 0.0
        %2177 = vmatpush1.msra.mxu0 %v2152
        %2178 = vmatprep.subr.mxu0 0.0
        %2179 = vmatpush1.msra.mxu0 %v2153
        %2180 = vmatprep.subr.mxu0 0.0
        %2181 = vmatpush1.msra.mxu0 %v2154
        %2182 = vmatprep.subr.mxu0 0.0
        %2183 = vmatpush1.msra.mxu0 %v2155
        %2184 = vmatprep.subr.mxu0 0.0
        %2185 = vmatpush1.msra.mxu0 %v2156
        %2186 = vmatprep.subr.mxu0 0.0
        %2187 = vmatpush1.msra.mxu0 %v2157
        %2188 = vmatprep.subr.mxu0 0.0
        %2189 = vmatpush1.msra.mxu0 %v2158
        %2190 = vmatprep.subr.mxu0 0.0
        %2191 = vmatpush1.msra.mxu0 %v2159
        %2192 = vmatprep.subr.mxu0 0.0
        %2193 = vmatpush1.msra.mxu0 0.0
        %2194 = vmatprep.subr.mxu0 0.0
        %2195 = vmatpush1.msra.mxu0 0.0
        %2196 = vmatprep.subr.mxu0 0.0
        %2197 = vmatpush1.msra.mxu0 0.0
        %2198 = vmatprep.subr.mxu0 0.0
        %2199 = vmatpush1.msra.mxu0 0.0
        %2200 = vmatprep.subr.mxu0 0.0
        %2201 = vmatpush1.msra.mxu0 0.0
        %2202 = vmatprep.subr.mxu0 0.0
        %2203 = vmatpush1.msra.mxu0 0.0
        %2204 = vmatprep.subr.mxu0 0.0
        %2205 = vmatpush1.msra.mxu0 0.0
        %2206 = vmatprep.subr.mxu0 0.0
        %2207 = vmatpush1.msra.mxu0 0.0
        %2208 = vmatprep.subr.mxu0 0.0
        %2209 = vmatpush1.msra.mxu0 0.0
        %2210 = vmatprep.subr.mxu0 0.0
        %2211 = vmatpush1.msra.mxu0 0.0
        %2212 = vmatprep.subr.mxu0 0.0
        %2213 = vmatpush1.msra.mxu0 0.0
        %2214 = vmatprep.subr.mxu0 0.0
        %2215 = vmatpush1.msra.mxu0 0.0
        %2216 = vmatprep.subr.mxu0 0.0
        %2217 = vmatpush1.msra.mxu0 0.0
        %2218 = vmatprep.subr.mxu0 0.0
        %2219 = vmatpush1.msra.mxu0 0.0
        %2220 = vmatprep.subr.mxu0 0.0
        %2221 = vmatpush1.msra.mxu0 0.0
        %2222 = vmatprep.subr.mxu0 0.0
        %2223 = vmatpush1.msra.mxu0 0.0
        %2224 = vmatprep.mubr.f32.mxu0 0.0
        %2225 = vmatmul.mubr.f32.gmra.mrb[0].mxu0 %v2140
        %v2226 = vpop.f32.mrb[0].mxu0
        %v2227 = vadd.f32 0.0, %v2226
        %v2228 = vpop.f32.mrb[0].mxu0
        %2229 = vdwg.mxu0
        %v2230 = vadd.f32 %v2143, %v2227
        %2231 = vst [vmem:[#allocation6] sm:$0xff] %v2230
      $region84: #{net_forward.1} parent=71 // pred_fallthru
        _
      %p2232 = scmp.eq.s32.totalorder %s30, 4
      %p2233 = pnand %p2232, %p568
      %p2234 = pneg %p2233
      // Predicated region
      $region85: #{net_forward.1} parent=71 // pred_check
        _
      $region86: #{net_forward.1} parent=71 // pred_check_branch
        %2236 = sbr.rel (%p2233) target = $region88
      $region87: #{net_forward.1} parent=71 // pred_region
        %v2237 = vld [vmem:[#allocation6] sm:$0xff]
        %v2238 = vld [vmem:[%s11] sm:$0x1]
        %v2240 = vlaneseq
        %v2241 = vshrl.u32 %v2240, 7
        %v2242 = vsub.s32 0, %v2241
        %v2243 = vrot.slane %v2238, %v2242
        %v2245 = vadd.f32 %v2237, %v2243
        %v2246 = vmax.f32 %v2245, 0.0
        %v2247 = vld [vmem:[%s12] sm:$0xff]
        %v2248 = vld [vmem:[%s12 + $0x8] sm:$0xff]
        %v2249 = vld [vmem:[%s12 + $0x10] sm:$0xff]
        %v2250 = vld [vmem:[%s12 + $0x18] sm:$0xff]
        %v2251 = vld [vmem:[%s12 + $0x20] sm:$0xff]
        %v2252 = vld [vmem:[%s12 + $0x28] sm:$0xff]
        %v2253 = vld [vmem:[%s12 + $0x30] sm:$0xff]
        %v2254 = vld [vmem:[%s12 + $0x38] sm:$0xff]
        %v2255 = vld [vmem:[%s12 + $0x40] sm:$0xff]
        %v2256 = vld [vmem:[%s12 + $0x48] sm:$0xff]
        %v2257 = vld [vmem:[%s12 + $0x50] sm:$0xff]
        %v2258 = vld [vmem:[%s12 + $0x58] sm:$0xff]
        %v2259 = vld [vmem:[%s12 + $0x60] sm:$0xff]
        %v2260 = vld [vmem:[%s12 + $0x68] sm:$0xff]
        %v2261 = vld [vmem:[%s12 + $0x70] sm:$0xff]
        %v2262 = vld [vmem:[%s12 + $0x78] sm:$0xff]
        %v2263 = vld [vmem:[%s13] sm:$0x1]
        %v2265 = vlaneseq
        %v2266 = vshrl.u32 %v2265, 7
        %v2267 = vsub.s32 0, %v2266
        %v2268 = vrot.slane %v2263, %v2267
        %2270 = vmatprep.subr.mxu0 0.0
        %2271 = vmatpush1.msra.mxu0 %v2247
        %2272 = vmatprep.subr.mxu0 0.0
        %2273 = vmatpush1.msra.mxu0 %v2248
        %2274 = vmatprep.subr.mxu0 0.0
        %2275 = vmatpush1.msra.mxu0 %v2249
        %2276 = vmatprep.subr.mxu0 0.0
        %2277 = vmatpush1.msra.mxu0 %v2250
        %2278 = vmatprep.subr.mxu0 0.0
        %2279 = vmatpush1.msra.mxu0 %v2251
        %2280 = vmatprep.subr.mxu0 0.0
        %2281 = vmatpush1.msra.mxu0 %v2252
        %2282 = vmatprep.subr.mxu0 0.0
        %2283 = vmatpush1.msra.mxu0 %v2253
        %2284 = vmatprep.subr.mxu0 0.0
        %2285 = vmatpush1.msra.mxu0 %v2254
        %2286 = vmatprep.subr.mxu0 0.0
        %2287 = vmatpush1.msra.mxu0 %v2255
        %2288 = vmatprep.subr.mxu0 0.0
        %2289 = vmatpush1.msra.mxu0 %v2256
        %2290 = vmatprep.subr.mxu0 0.0
        %2291 = vmatpush1.msra.mxu0 %v2257
        %2292 = vmatprep.subr.mxu0 0.0
        %2293 = vmatpush1.msra.mxu0 %v2258
        %2294 = vmatprep.subr.mxu0 0.0
        %2295 = vmatpush1.msra.mxu0 %v2259
        %2296 = vmatprep.subr.mxu0 0.0
        %2297 = vmatpush1.msra.mxu0 %v2260
        %2298 = vmatprep.subr.mxu0 0.0
        %2299 = vmatpush1.msra.mxu0 %v2261
        %2300 = vmatprep.subr.mxu0 0.0
        %2301 = vmatpush1.msra.mxu0 %v2262
        %2302 = vmatprep.subr.mxu0 0.0
        %2303 = vmatpush1.msra.mxu0 0.0
        %2304 = vmatprep.subr.mxu0 0.0
        %2305 = vmatpush1.msra.mxu0 0.0
        %2306 = vmatprep.subr.mxu0 0.0
        %2307 = vmatpush1.msra.mxu0 0.0
        %2308 = vmatprep.subr.mxu0 0.0
        %2309 = vmatpush1.msra.mxu0 0.0
        %2310 = vmatprep.subr.mxu0 0.0
        %2311 = vmatpush1.msra.mxu0 0.0
        %2312 = vmatprep.subr.mxu0 0.0
        %2313 = vmatpush1.msra.mxu0 0.0
        %2314 = vmatprep.subr.mxu0 0.0
        %2315 = vmatpush1.msra.mxu0 0.0
        %2316 = vmatprep.subr.mxu0 0.0
        %2317 = vmatpush1.msra.mxu0 0.0
        %2318 = vmatprep.subr.mxu0 0.0
        %2319 = vmatpush1.msra.mxu0 0.0
        %2320 = vmatprep.subr.mxu0 0.0
        %2321 = vmatpush1.msra.mxu0 0.0
        %2322 = vmatprep.subr.mxu0 0.0
        %2323 = vmatpush1.msra.mxu0 0.0
        %2324 = vmatprep.subr.mxu0 0.0
        %2325 = vmatpush1.msra.mxu0 0.0
        %2326 = vmatprep.subr.mxu0 0.0
        %2327 = vmatpush1.msra.mxu0 0.0
        %2328 = vmatprep.subr.mxu0 0.0
        %2329 = vmatpush1.msra.mxu0 0.0
        %2330 = vmatprep.subr.mxu0 0.0
        %2331 = vmatpush1.msra.mxu0 0.0
        %2332 = vmatprep.subr.mxu0 0.0
        %2333 = vmatpush1.msra.mxu0 0.0
        %2334 = vmatprep.mubr.f32.mxu0 0.0
        %2335 = vmatmul.mubr.f32.gmra.mrb[0].mxu0 %v2246
        %v2336 = vpop.f32.mrb[0].mxu0
        %v2337 = vadd.f32 %v2268, %v2336
        %v2338 = vpop.f32.mrb[0].mxu0
        %2339 = vdwg.mxu0
        %2340 = vst [vmem:[%s14] sm:$0xff] %v2337
      $region88: #{net_forward.1} parent=71 // pred_fallthru
        _
      // Predicated region
      $region89: #{net_forward.1} parent=71 // pred_check
        %p2341 = pneg %p364
      $region90: #{net_forward.1} parent=71 // pred_check_branch
        %2343 = sbr.rel (%p2341) target = $region92
      $region91: #{net_forward.1} parent=71 // pred_region
        _
      $region92: #{net_forward.1} parent=71 // pred_fallthru
        _
      // Predicated region
      $region93: #{net_forward.1} parent=71 // pred_check
        %p2344 = pneg %p364
      $region94: #{net_forward.1} parent=71 // pred_check_branch
        %2346 = sbr.rel (%p2344) target = $region96
      $region95: #{net_forward.1} parent=71 // pred_region
        _
      $region96: #{net_forward.1} parent=71 // pred_fallthru
        _
    $region72: #{net_forward.1} parent=5 // pred_fallthru
      _
    %p2347 = scmp.le.s32.totalorder 2, %s21
    // Predicated region
    $region97: #{net_forward.1} parent=5 // pred_check
      %p2348 = pneg %p2347
    $region98: #{net_forward.1} parent=5 // pred_check_branch
      %2350 = sbr.rel (%p2348) target = $region100
    $region99: #{net_forward.1} parent=5 // pred_region
      %s2351 = ssub.s32 %s21, 2
    $region100: #{net_forward.1} parent=5 // pred_fallthru
      _
  $region6: #{net_forward.1} parent=0 // loop_footer
    %s25 = sadd.s32 1, %s21
  $region7: #{net_forward.1} parent=0 // loop_footer_branch
    %20 = sbr.rel target = $region3
  $region8: #{net_forward.1} parent=0 // loop_exit
    _

</llo_original>
